<compile_context>
chip_gen: v5e
topology: v5e:2x2
jax: 0.10.0
libtpu: 0.0.40
codegen_flags: <defaults>
</compile_context>

<pallas_src>
import jax
import jax.numpy as jnp
import numpy as np
from jax.experimental import pallas as pl
from jax.experimental.pallas import tpu as pltpu


def _round_up(x, m):
    return ((x + m - 1) // m) * m


def _lane(c):
    """Lane-padded width: VMEM pads the minor dim to 128."""
    return _round_up(c, 128)


def _conv1d_relu_pool(x2, w, b, L):
    """Conv1d(k=3, pad=1) + bias + ReLU + MaxPool1d(2) on row-major activations.

    x2: (N, Ci) f32, rows ordered (batch-major, then position l in [0, L)).
    w : (3*Ci, Co) bf16, rows stacked tap*Ci + ci; tap0 <-> x[l-1], tap2 <-> x[l+1].
    b : (1, Co) f32.
    Returns (N//2, Co) f32 (pooled along l).
    """
    N, Ci = x2.shape
    Co = w.shape[1]
    # Position-within-sequence of every row as a single (N, 1) iota; the
    # where() broadcasts it against the (N, Ci) pieces (no (N, Ci) int32 mask
    # materialized per layer/grid step).
    l_ids = jax.lax.broadcasted_iota(jnp.int32, (N, 1), 0) % L
    # x[l-1] / x[l+1] via XLU sublane rotation + boundary mask.  The wrapped
    # rows (l==0 / l==L-1) are exactly the rows the conv zero-pads, so the
    # cross-batch wrap of the roll never leaks into the result.  Rolls stay in
    # f32 (known-good sublane-roll lowering); pieces drop to bf16 before the
    # lane concat so the im2col copy moves 2-byte elements.
    xm1 = jnp.where(l_ids == 0, 0.0, pltpu.roll(x2, shift=1, axis=0))
    xp1 = jnp.where(l_ids == L - 1, 0.0, pltpu.roll(x2, shift=N - 1, axis=0))
    lhs = jnp.concatenate(
        [xm1.astype(jnp.bfloat16), x2.astype(jnp.bfloat16),
         xp1.astype(jnp.bfloat16)], axis=-1)
    # im2col: one (N, 3*Ci) LHS -> a single MXU dot (bf16 operands, f32 accum).
    y = jnp.dot(lhs, w, preferred_element_type=jnp.float32)
    y = jnp.maximum(y + b, 0.0)                      # bias + ReLU in f32 (VPU)
    # MaxPool1d(2): max over adjacent row pairs; L is even so pairs never
    # cross a batch element.
    return jnp.max(y.reshape(N // 2, 2, Co), axis=1)


def enhanced_cnn_kernel(x_ref, w1_ref, b1_ref, w2_ref, b2_ref, wl_ref, bl_ref,
                        out_ref):
    TB, L, Cin = x_ref.shape
    # Input arrives as bf16 (half HBM bytes); upcast once so the (TB,L,Cin) ->
    # (TB*L,Cin) fold and the sublane rolls run on the proven f32 layout path.
    x2 = x_ref[...].astype(jnp.float32).reshape(TB * L, Cin)    # (TB*L, Cin)
    h = _conv1d_relu_pool(x2, w1_ref[...], b1_ref[...], L)      # (TB*L/2, 64)
    h = _conv1d_relu_pool(h, w2_ref[...], b2_ref[...], L // 2)  # (TB*L/4, 128)
    Lq = L // 4
    # l-major flatten; the Linear weight was pre-permuted in the wrapper so
    # this matches torch's channel-major flatten.  Reshape in f32 (known-good
    # sublane->lane relayout), then cast once to bf16 for the MXU.
    flat = h.reshape(TB, Lq * 128).astype(jnp.bfloat16)
    out = jnp.dot(flat, wl_ref[...], preferred_element_type=jnp.float32)
    out_ref[...] = (out + bl_ref[...]).astype(out_ref.dtype)    # lane-dense store


def _vmem_capacity_bytes():
    """Physical per-core VMEM; falls back to the smallest current generation
    (v7x: 64 MiB per TensorCore) if the query is unavailable."""
    try:
        return int(pltpu.get_tpu_info().vmem_capacity_bytes)
    except Exception:
        return 64 * 1024 * 1024


def _per_batch_elem_vmem_bytes(L, cin, out_p):
    """Padding-aware upper bound (lanes padded to 128) on the VMEM bytes one
    batch element contributes: double-buffered pipelined input/output blocks
    plus single-copy in-kernel intermediates."""
    b = 0
    b += 2 * _round_up(L, 16) * _lane(cin) * 2        # bf16 input block (x2 buffers)
    b += L * _lane(cin) * (3 * 4 + 3 * 2)             # layer-1 f32 center/shifts + bf16 pieces
    b += L * _lane(3 * cin) * 2                       # layer-1 im2col LHS (bf16)
    b += L * _lane(64) * 4                            # conv1 f32 output, pre-pool
    b += (L // 2) * _lane(64) * 4                     # pooled h1 (f32)
    b += (L // 2) * _lane(64) * (3 * 4 + 3 * 2)       # layer-2 f32 center/shifts + bf16 pieces
    b += (L // 2) * _lane(3 * 64) * 2                 # layer-2 im2col LHS (bf16)
    b += (L // 2) * _lane(128) * 4                    # conv2 f32 output, pre-pool
    b += (L // 4) * _lane(128) * (4 + 4 + 2)          # pooled h2 (f32) + f32 flatten + bf16 cast
    b += 2 * out_p * 4                                # f32 output block (x2 buffers)
    return b


def _divisors_desc(n):
    divs = set()
    d = 1
    while d * d <= n:
        if n % d == 0:
            divs.add(d)
            divs.add(n // d)
        d += 1
    return sorted(divs, reverse=True)


def _choose_batch_tile(batch, L, cin, out_p, budget_bytes):
    """Largest batch tile dividing `batch` whose padding-aware footprint fits
    `budget_bytes`.  Prefers tiles < batch so the grid has >= 2 steps (keeps
    the second v7x TensorCore busy and overlaps DMA with compute).  Always
    falls back to the smallest divisor, never one that exceeds the budget if a
    fitting one exists."""
    per = _per_batch_elem_vmem_bytes(L, cin, out_p)
    divs = _divisors_desc(batch)
    prefer = [d for d in divs if d < batch] or divs
    for tb in prefer:
        if tb * per <= budget_bytes:
            return tb
    return prefer[-1]   # == 1 for batch > 1: minimal footprint


def enhanced_cnn_forward(src, params, seq_len, output_dim, batch_tile=None):
    """src: (B, seq_len, input_dim) f32.  params in torch layouts."""
    W1, b1, W2, b2, Wl, bl = params
    B, L, Cin = src.shape
    assert L == seq_len
    # TODO(synk): seq_len not divisible by 4 (torch MaxPool1d floors) would need
    # a per-sequence row drop before each pool; not supported here.
    assert seq_len % 4 == 0, "seq_len must be a multiple of 4"
    assert B % seq_len == 0, "final .view(-1, seq_len, output_dim) needs B % seq_len == 0"
    Lq = seq_len // 4
    Op = _lane(output_dim)   # lane-dense padded output width; sliced back outside

    # torch Conv1d weight (Co, Ci, 3) -> im2col-stacked (3*Ci, Co) bf16 MXU operand.
    w1_k = jnp.transpose(W1, (2, 1, 0)).reshape(3 * Cin, 64).astype(jnp.bfloat16)
    w2_k = jnp.transpose(W2, (2, 1, 0)).reshape(3 * 64, 128).astype(jnp.bfloat16)
    # torch Linear weight (O, 128*Lq) indexes the flatten channel-major (c*Lq+l);
    # the kernel flattens l-major (l*128+c) -> permute, zero-pad the output dim
    # to a lane-dense width, then bf16.
    wl_perm = (Wl.reshape(output_dim, 128, Lq).transpose(2, 1, 0)
                 .reshape(Lq * 128, output_dim))
    wl_k = jnp.pad(wl_perm, ((0, 0), (0, Op - output_dim))).astype(jnp.bfloat16)
    b1_k = b1.reshape(1, 64).astype(jnp.float32)
    b2_k = b2.reshape(1, 128).astype(jnp.float32)
    bl_k = jnp.pad(bl.astype(jnp.float32).reshape(1, output_dim),
                   ((0, 0), (0, Op - output_dim)))

    # Generation-aware VMEM budget (v7x: 64 MiB/TC, v5e/v6e: 128 MiB): raise the
    # scoped limit above the 16/32 MiB defaults and size the batch tile against
    # a padding-aware footprint, leaving headroom for weights/compiler scratch.
    vmem_cap = _vmem_capacity_bytes()
    vmem_limit = max(32 << 20, min(int(0.9 * vmem_cap), 100 << 20))
    fixed_bytes = (2 * (_round_up(3 * Cin, 16) * _lane(64)
                        + _round_up(3 * 64, 16) * _lane(128)
                        + _round_up(Lq * 128, 16) * Op) * 2
                   + 2 * 8 * (_lane(64) + _lane(128) + Op) * 4)
    budget = max(4 << 20, int(0.6 * vmem_limit) - fixed_bytes)

    TB = batch_tile if batch_tile is not None else _choose_batch_tile(
        B, L, Cin, Op, budget)
    assert B % TB == 0, (B, TB)

    const2 = lambda i: (0, 0)
    out = pl.pallas_call(
        enhanced_cnn_kernel,
        out_shape=jax.ShapeDtypeStruct((B, Op), jnp.float32),
        grid_spec=pltpu.PrefetchScalarGridSpec(
            num_scalar_prefetch=0,
            grid=(B // TB,),
            in_specs=[
                pl.BlockSpec((TB, L, Cin), lambda i: (i, 0, 0)),  # bf16 batch tile
                pl.BlockSpec((3 * Cin, 64), const2),              # resident weights
                pl.BlockSpec((1, 64), const2),
                pl.BlockSpec((3 * 64, 128), const2),
                pl.BlockSpec((1, 128), const2),
                pl.BlockSpec((Lq * 128, Op), const2),
                pl.BlockSpec((1, Op), const2),
            ],
            out_specs=pl.BlockSpec((TB, Op), lambda i: (i, 0)),   # lane-dense output
        ),
        compiler_params=pltpu.CompilerParams(
            dimension_semantics=("parallel",),   # pipeline DMAs + megacore shard
            vmem_limit_bytes=vmem_limit,
        ),
    )(src.astype(jnp.bfloat16), w1_k, b1_k, w2_k, b2_k, wl_k, bl_k)

    # Drop the lane padding, then match torch:
    # output.view(-1, src.size(2), output_dim); src.size(2)==seq_len after transpose.
    return out[:, :output_dim].reshape(-1, seq_len, output_dim)


def ref_forward(src, params, seq_len, output_dim):
    """Pure-JAX mirror of the PyTorch forward (NCL layout), for verification."""
    W1, b1, W2, b2, Wl, bl = params
    x = jnp.transpose(src, (0, 2, 1))                       # (B, Cin, L)
    dn = ('NCH', 'OIH', 'NCH')

    def conv_relu_pool(x, W, b):
        y = jax.lax.conv_general_dilated(x, W, (1,), [(1, 1)], dimension_numbers=dn)
        y = jnp.maximum(y + b[None, :, None], 0.0)
        B, C, L = y.shape
        return jnp.max(y.reshape(B, C, L // 2, 2), axis=-1)

    y = conv_relu_pool(x, W1, b1)
    y = conv_relu_pool(y, W2, b2)
    flat = y.reshape(y.shape[0], -1)                        # channel-major flatten
    out = flat @ Wl.T + bl
    return out.reshape(-1, seq_len, output_dim)


if __name__ == "__main__":
    # Small shapes consistent with the module; B=16 gives an auto-picked tile
    # of 8 (2-step grid) so the batch-tiled pipeline path is actually exercised.
    B, seq_len, input_dim, output_dim = 16, 8, 4, 16

    key = jax.random.PRNGKey(0)
    ks = jax.random.split(key, 7)
    src = jax.random.normal(ks[0], (B, seq_len, input_dim), jnp.float32)

    # Deterministic synthetic parameters (torch layouts).
    W1 = 0.10 * jax.random.normal(ks[1], (64, input_dim, 3), jnp.float32)
    b1 = 0.10 * jax.random.normal(ks[2], (64,), jnp.float32)
    W2 = 0.05 * jax.random.normal(ks[3], (128, 64, 3), jnp.float32)
    b2 = 0.10 * jax.random.normal(ks[4], (128,), jnp.float32)
    Wl = 0.05 * jax.random.normal(ks[5], (output_dim, 128 * (seq_len // 4)), jnp.float32)
    bl = 0.10 * jax.random.normal(ks[6], (output_dim,), jnp.float32)
    params = (W1, b1, W2, b2, Wl, bl)

    out = jax.block_until_ready(
        enhanced_cnn_forward(src, params, seq_len, output_dim))
    ref = jax.block_until_ready(ref_forward(src, params, seq_len, output_dim))

    assert out.shape == ref.shape, (out.shape, ref.shape)
    # bf16 MXU operands (f32 accumulation) -> slightly looser tolerance than f32.
    np.testing.assert_allclose(np.asarray(out), np.asarray(ref), rtol=2e-2, atol=2e-2)

    print("KERNEL_OK")
</pallas_src>

<mosaic_0001>
module attributes {stable_mosaic.version = 11 : i64} {
  func.func @enhanced_cnn_kernel(%arg0: i32, %arg1: memref<8x8x4xbf16, #tpu.memory_space<vmem>>, %arg2: memref<12x64xbf16, #tpu.memory_space<vmem>>, %arg3: memref<1x64xf32, #tpu.memory_space<vmem>>, %arg4: memref<192x128xbf16, #tpu.memory_space<vmem>>, %arg5: memref<1x128xf32, #tpu.memory_space<vmem>>, %arg6: memref<256x128xbf16, #tpu.memory_space<vmem>>, %arg7: memref<1x128xf32, #tpu.memory_space<vmem>>, %arg8: memref<8x128xf32, #tpu.memory_space<vmem>>) attributes {dimension_semantics = [#tpu.dimension_semantics<parallel>], iteration_bounds = array<i64: 2>, scalar_prefetch = 0 : i64, scratch_operands = 0 : i64, tpu.core_type = #tpu.core_type<tc>, window_params = [{transform_indices = @transform_0, window_bounds = array<i64: 8, 8, 4>}, {pipeline_mode = #tpu.pipeline_mode<synchronous>, transform_indices = @transform_1, window_bounds = array<i64: 12, 64>}, {pipeline_mode = #tpu.pipeline_mode<synchronous>, transform_indices = @transform_2, window_bounds = array<i64: 1, 64>}, {pipeline_mode = #tpu.pipeline_mode<synchronous>, transform_indices = @transform_3, window_bounds = array<i64: 192, 128>}, {pipeline_mode = #tpu.pipeline_mode<synchronous>, transform_indices = @transform_4, window_bounds = array<i64: 1, 128>}, {pipeline_mode = #tpu.pipeline_mode<synchronous>, transform_indices = @transform_5, window_bounds = array<i64: 256, 128>}, {pipeline_mode = #tpu.pipeline_mode<synchronous>, transform_indices = @transform_6, window_bounds = array<i64: 1, 128>}, {transform_indices = @transform_7, window_bounds = array<i64: 8, 128>}]} {
    %c0 = arith.constant 0 : index
    %c0_0 = arith.constant 0 : index
    %c0_1 = arith.constant 0 : index
    %0 = vector.load %arg1[%c0, %c0_0, %c0_1] : memref<8x8x4xbf16, #tpu.memory_space<vmem>>, vector<8x8x4xbf16>
    %1 = arith.extf %0 : vector<8x8x4xbf16> to vector<8x8x4xf32>
    %2 = vector.shape_cast %1 : vector<8x8x4xf32> to vector<64x4xf32>
    %c0_2 = arith.constant 0 : index
    %c0_3 = arith.constant 0 : index
    %3 = vector.load %arg2[%c0_2, %c0_3] : memref<12x64xbf16, #tpu.memory_space<vmem>>, vector<12x64xbf16>
    %c0_4 = arith.constant 0 : index
    %c0_5 = arith.constant 0 : index
    %4 = vector.load %arg3[%c0_4, %c0_5] : memref<1x64xf32, #tpu.memory_space<vmem>>, vector<1x64xf32>
    %5 = tpu.iota {dimensions = array<i32: 0>} : vector<64x1xi32>
    %c8_i32 = arith.constant 8 : i32
    %c0_i32 = arith.constant 0 : i32
    %6 = arith.cmpi eq, %c8_i32, %c0_i32 : i32
    %c1_i32 = arith.constant 1 : i32
    %7 = arith.select %6, %c1_i32, %c8_i32 : i32
    %8 = vector.broadcast %7 : i32 to vector<64x1xi32>
    %9 = arith.remsi %5, %8 : vector<64x1xi32>
    %c0_i32_6 = arith.constant 0 : i32
    %10 = vector.broadcast %c0_i32_6 : i32 to vector<64x1xi32>
    %11 = arith.cmpi ne, %9, %10 : vector<64x1xi32>
    %c0_i32_7 = arith.constant 0 : i32
    %12 = vector.broadcast %c0_i32_7 : i32 to vector<64x1xi32>
    %13 = arith.cmpi slt, %9, %12 : vector<64x1xi32>
    %c0_i32_8 = arith.constant 0 : i32
    %14 = arith.cmpi slt, %7, %c0_i32_8 : i32
    %15 = vector.broadcast %14 : i1 to vector<64x1xi1>
    %16 = vector.broadcast %15 : vector<64x1xi1> to vector<64x1xi1>
    %17 = arith.xori %13, %16 : vector<64x1xi1>
    %18 = arith.andi %17, %11 : vector<64x1xi1>
    %19 = vector.broadcast %7 : i32 to vector<64x1xi32>
    %20 = arith.addi %9, %19 : vector<64x1xi32>
    %21 = arith.select %18, %20, %9 : vector<64x1xi1>, vector<64x1xi32>
    %c0_i32_9 = arith.constant 0 : i32
    %22 = vector.broadcast %c0_i32_9 : i32 to vector<64x1xi32>
    %23 = arith.cmpi eq, %21, %22 : vector<64x1xi32>
    %c1_i32_10 = arith.constant 1 : i32
    %24 = tpu.dynamic_rotate %2 by %c1_i32_10 dim 0 : vector<64x4xf32>, i32 -> vector<64x4xf32>
    %cst = arith.constant 0.000000e+00 : f32
    %25 = vector.shape_cast %23 : vector<64x1xi1> to vector<64x1xi1>
    %26 = vector.broadcast %25 : vector<64x1xi1> to vector<64x4xi1>
    %27 = vector.broadcast %cst : f32 to vector<64x4xf32>
    %28 = arith.select %26, %27, %24 : vector<64x4xi1>, vector<64x4xf32>
    %c7_i32 = arith.constant 7 : i32
    %29 = vector.broadcast %c7_i32 : i32 to vector<64x1xi32>
    %30 = arith.cmpi eq, %21, %29 : vector<64x1xi32>
    %c63_i32 = arith.constant 63 : i32
    %31 = tpu.dynamic_rotate %2 by %c63_i32 dim 0 : vector<64x4xf32>, i32 -> vector<64x4xf32>
    %cst_11 = arith.constant 0.000000e+00 : f32
    %32 = vector.shape_cast %30 : vector<64x1xi1> to vector<64x1xi1>
    %33 = vector.broadcast %32 : vector<64x1xi1> to vector<64x4xi1>
    %34 = vector.broadcast %cst_11 : f32 to vector<64x4xf32>
    %35 = arith.select %33, %34, %31 : vector<64x4xi1>, vector<64x4xf32>
    %36 = arith.truncf %28 : vector<64x4xf32> to vector<64x4xbf16>
    %37 = arith.truncf %2 : vector<64x4xf32> to vector<64x4xbf16>
    %38 = arith.truncf %35 : vector<64x4xf32> to vector<64x4xbf16>
    %39 = tpu.concatenate %36, %37, %38 in 1 : vector<64x4xbf16>, vector<64x4xbf16>, vector<64x4xbf16> -> vector<64x12xbf16>
    %cst_12 = arith.constant dense<0.000000e+00> : vector<64x64xf32>
    %40 = tpu.matmul %39, %3, %cst_12 {dimension_numbers = #tpu.dot_dimension_numbers<[1], [0], [0], [1], [0, 0, 1, 1], [], []>} : vector<64x12xbf16>, vector<12x64xbf16>, vector<64x64xf32> -> vector<64x64xf32>
    %41 = vector.broadcast %4 : vector<1x64xf32> to vector<64x64xf32>
    %42 = arith.addf %40, %41 : vector<64x64xf32>
    %cst_13 = arith.constant 0.000000e+00 : f32
    %43 = vector.broadcast %cst_13 : f32 to vector<64x64xf32>
    %44 = arith.maximumf %42, %43 : vector<64x64xf32>
    %45 = vector.shape_cast %44 : vector<64x64xf32> to vector<32x2x64xf32>
    %cst_14 = arith.constant dense<0xFF800000> : vector<32x64xf32>
    %46 = vector.multi_reduction <maximumf>, %45, %cst_14 [1] : vector<32x2x64xf32> to vector<32x64xf32>
    %c0_15 = arith.constant 0 : index
    %c0_16 = arith.constant 0 : index
    %47 = vector.load %arg4[%c0_15, %c0_16] : memref<192x128xbf16, #tpu.memory_space<vmem>>, vector<192x128xbf16>
    %c0_17 = arith.constant 0 : index
    %c0_18 = arith.constant 0 : index
    %48 = vector.load %arg5[%c0_17, %c0_18] : memref<1x128xf32, #tpu.memory_space<vmem>>, vector<1x128xf32>
    %49 = tpu.iota {dimensions = array<i32: 0>} : vector<32x1xi32>
    %c4_i32 = arith.constant 4 : i32
    %c0_i32_19 = arith.constant 0 : i32
    %50 = arith.cmpi eq, %c4_i32, %c0_i32_19 : i32
    %c1_i32_20 = arith.constant 1 : i32
    %51 = arith.select %50, %c1_i32_20, %c4_i32 : i32
    %52 = vector.broadcast %51 : i32 to vector<32x1xi32>
    %53 = arith.remsi %49, %52 : vector<32x1xi32>
    %c0_i32_21 = arith.constant 0 : i32
    %54 = vector.broadcast %c0_i32_21 : i32 to vector<32x1xi32>
    %55 = arith.cmpi ne, %53, %54 : vector<32x1xi32>
    %c0_i32_22 = arith.constant 0 : i32
    %56 = vector.broadcast %c0_i32_22 : i32 to vector<32x1xi32>
    %57 = arith.cmpi slt, %53, %56 : vector<32x1xi32>
    %c0_i32_23 = arith.constant 0 : i32
    %58 = arith.cmpi slt, %51, %c0_i32_23 : i32
    %59 = vector.broadcast %58 : i1 to vector<32x1xi1>
    %60 = vector.broadcast %59 : vector<32x1xi1> to vector<32x1xi1>
    %61 = arith.xori %57, %60 : vector<32x1xi1>
    %62 = arith.andi %61, %55 : vector<32x1xi1>
    %63 = vector.broadcast %51 : i32 to vector<32x1xi32>
    %64 = arith.addi %53, %63 : vector<32x1xi32>
    %65 = arith.select %62, %64, %53 : vector<32x1xi1>, vector<32x1xi32>
    %c0_i32_24 = arith.constant 0 : i32
    %66 = vector.broadcast %c0_i32_24 : i32 to vector<32x1xi32>
    %67 = arith.cmpi eq, %65, %66 : vector<32x1xi32>
    %c1_i32_25 = arith.constant 1 : i32
    %68 = tpu.dynamic_rotate %46 by %c1_i32_25 dim 0 : vector<32x64xf32>, i32 -> vector<32x64xf32>
    %cst_26 = arith.constant 0.000000e+00 : f32
    %69 = vector.shape_cast %67 : vector<32x1xi1> to vector<32x1xi1>
    %70 = vector.broadcast %69 : vector<32x1xi1> to vector<32x64xi1>
    %71 = vector.broadcast %cst_26 : f32 to vector<32x64xf32>
    %72 = arith.select %70, %71, %68 : vector<32x64xi1>, vector<32x64xf32>
    %c3_i32 = arith.constant 3 : i32
    %73 = vector.broadcast %c3_i32 : i32 to vector<32x1xi32>
    %74 = arith.cmpi eq, %65, %73 : vector<32x1xi32>
    %c31_i32 = arith.constant 31 : i32
    %75 = tpu.dynamic_rotate %46 by %c31_i32 dim 0 : vector<32x64xf32>, i32 -> vector<32x64xf32>
    %cst_27 = arith.constant 0.000000e+00 : f32
    %76 = vector.shape_cast %74 : vector<32x1xi1> to vector<32x1xi1>
    %77 = vector.broadcast %76 : vector<32x1xi1> to vector<32x64xi1>
    %78 = vector.broadcast %cst_27 : f32 to vector<32x64xf32>
    %79 = arith.select %77, %78, %75 : vector<32x64xi1>, vector<32x64xf32>
    %80 = arith.truncf %72 : vector<32x64xf32> to vector<32x64xbf16>
    %81 = arith.truncf %46 : vector<32x64xf32> to vector<32x64xbf16>
    %82 = arith.truncf %79 : vector<32x64xf32> to vector<32x64xbf16>
    %83 = tpu.concatenate %80, %81, %82 in 1 : vector<32x64xbf16>, vector<32x64xbf16>, vector<32x64xbf16> -> vector<32x192xbf16>
    %cst_28 = arith.constant dense<0.000000e+00> : vector<32x128xf32>
    %84 = tpu.matmul %83, %47, %cst_28 {dimension_numbers = #tpu.dot_dimension_numbers<[1], [0], [0], [1], [0, 0, 1, 1], [], []>} : vector<32x192xbf16>, vector<192x128xbf16>, vector<32x128xf32> -> vector<32x128xf32>
    %85 = vector.broadcast %48 : vector<1x128xf32> to vector<32x128xf32>
    %86 = arith.addf %84, %85 : vector<32x128xf32>
    %cst_29 = arith.constant 0.000000e+00 : f32
    %87 = vector.broadcast %cst_29 : f32 to vector<32x128xf32>
    %88 = arith.maximumf %86, %87 : vector<32x128xf32>
    %89 = vector.shape_cast %88 : vector<32x128xf32> to vector<16x2x128xf32>
    %cst_30 = arith.constant dense<0xFF800000> : vector<16x128xf32>
    %90 = vector.multi_reduction <maximumf>, %89, %cst_30 [1] : vector<16x2x128xf32> to vector<16x128xf32>
    %91 = vector.shape_cast %90 : vector<16x128xf32> to vector<8x256xf32>
    %92 = arith.truncf %91 : vector<8x256xf32> to vector<8x256xbf16>
    %c0_31 = arith.constant 0 : index
    %c0_32 = arith.constant 0 : index
    %93 = vector.load %arg6[%c0_31, %c0_32] : memref<256x128xbf16, #tpu.memory_space<vmem>>, vector<256x128xbf16>
    %cst_33 = arith.constant dense<0.000000e+00> : vector<8x128xf32>
    %94 = tpu.matmul %92, %93, %cst_33 {dimension_numbers = #tpu.dot_dimension_numbers<[1], [0], [0], [1], [0, 0, 1, 1], [], []>} : vector<8x256xbf16>, vector<256x128xbf16>, vector<8x128xf32> -> vector<8x128xf32>
    %c0_34 = arith.constant 0 : index
    %c0_35 = arith.constant 0 : index
    %95 = vector.load %arg7[%c0_34, %c0_35] : memref<1x128xf32, #tpu.memory_space<vmem>>, vector<1x128xf32>
    %96 = vector.broadcast %95 : vector<1x128xf32> to vector<8x128xf32>
    %97 = arith.addf %94, %96 : vector<8x128xf32>
    %c0_36 = arith.constant 0 : index
    %c0_37 = arith.constant 0 : index
    %98 = vector.load %arg8[%c0_36, %c0_37] : memref<8x128xf32, #tpu.memory_space<vmem>>, vector<8x128xf32>
    tpu.vector_store %arg8[%c0_36, %c0_37], %97 {strides = array<i32>} : memref<8x128xf32, #tpu.memory_space<vmem>>, vector<8x128xf32>,
    return
  }
  func.func @transform_0(%arg0: i32) -> (i32, i32, i32) {
    %c0_i32 = arith.constant 0 : i32
    %c0_i32_0 = arith.constant 0 : i32
    %c0_i32_1 = arith.constant 0 : i32
    return %arg0, %c0_i32, %c0_i32_0 : i32, i32, i32
  }
  func.func @transform_1(%arg0: i32) -> (i32, i32) {
    %c0_i32 = arith.constant 0 : i32
    %c0_i32_0 = arith.constant 0 : i32
    %c0_i32_1 = arith.constant 0 : i32
    return %c0_i32, %c0_i32_0 : i32, i32
  }
  func.func @transform_2(%arg0: i32) -> (i32, i32) {
    %c0_i32 = arith.constant 0 : i32
    %c0_i32_0 = arith.constant 0 : i32
    %c0_i32_1 = arith.constant 0 : i32
    return %c0_i32, %c0_i32_0 : i32, i32
  }
  func.func @transform_3(%arg0: i32) -> (i32, i32) {
    %c0_i32 = arith.constant 0 : i32
    %c0_i32_0 = arith.constant 0 : i32
    %c0_i32_1 = arith.constant 0 : i32
    return %c0_i32, %c0_i32_0 : i32, i32
  }
  func.func @transform_4(%arg0: i32) -> (i32, i32) {
    %c0_i32 = arith.constant 0 : i32
    %c0_i32_0 = arith.constant 0 : i32
    %c0_i32_1 = arith.constant 0 : i32
    return %c0_i32, %c0_i32_0 : i32, i32
  }
  func.func @transform_5(%arg0: i32) -> (i32, i32) {
    %c0_i32 = arith.constant 0 : i32
    %c0_i32_0 = arith.constant 0 : i32
    %c0_i32_1 = arith.constant 0 : i32
    return %c0_i32, %c0_i32_0 : i32, i32
  }
  func.func @transform_6(%arg0: i32) -> (i32, i32) {
    %c0_i32 = arith.constant 0 : i32
    %c0_i32_0 = arith.constant 0 : i32
    %c0_i32_1 = arith.constant 0 : i32
    return %c0_i32, %c0_i32_0 : i32, i32
  }
  func.func @transform_7(%arg0: i32) -> (i32, i32) {
    %c0_i32 = arith.constant 0 : i32
    %c0_i32_0 = arith.constant 0 : i32
    return %arg0, %c0_i32 : i32, i32
  }
}

</mosaic_0001>

<llo_original>
// kernel: tpu_custom_call.1
$region0: #{tpu_custom_call.1}
  #allocation0 [shape = 'u32[]', space=smem, size = 0x4, offset = 0x4, fixed_abs, tag = 'smem constant byte address 0x4 - core index']
  #allocation1 [shape = 'u32[72,128]{1,0:T(1,128)}', space=vmem, size = 0x9000, scoped, tag = 'internal scratch']
  %s0 = inlined_call_operand.vmem [shape: bf16[16,8,4], index: 0, kind: input, shape index: {}]
  %s1 = inlined_call_operand.vmem [shape: bf16[12,64], index: 1, kind: input, shape index: {}]
  %s2 = inlined_call_operand.vmem [shape: f32[1,64], index: 2, kind: input, shape index: {}]
  %s3 = inlined_call_operand.hbm [shape: bf16[192,128], index: 3, kind: input, shape index: {}]
  %s4 = inlined_call_operand.vmem [shape: f32[1,128], index: 4, kind: input, shape index: {}]
  %s5 = inlined_call_operand.hbm [shape: bf16[256,128], index: 5, kind: input, shape index: {}]
  %s6 = inlined_call_operand.vmem [shape: f32[1,128], index: 6, kind: input, shape index: {}]
  %s7 = inlined_call_operand.hbm [shape: f32[16,128], index: 7, kind: output, shape index: {}]
  %s8 = sld [smem:[#allocation0]]
  $region69: #{tpu_custom_call.1} parent=0
    _
  %s10 = ssub.s32 1, %s8
  %s11 = scalar_select 0, %s10, %s8
  $region1: #{tpu_custom_call.1} parent=0
    #allocation2 [shape = 'u8[49152]{0}', space=vmem, size = 0xc000, scoped, tag = 'input window, operand 3, single buffered']
    #allocation3 [shape = 's32[2]{0}', space=sflag, size = 0x8, scoped, tag = 'scoped memory for tpu_custom_call.1']
    #allocation4 [shape = 's32[2]{0}', space=sflag, size = 0x8, scoped, tag = 'scoped memory for tpu_custom_call.1']
    #allocation5 [shape = 'u8[65536]{0}', space=vmem, size = 0x10000, scoped, tag = 'input window, operand 5, single buffered']
    #allocation6 [shape = 's32[1]{0}', space=sflag, size = 0x4, scoped, tag = 'scoped memory for tpu_custom_call.1']
    #allocation7 [shape = 'u8[8192]{0}', space=vmem, size = 0x2000, scoped, tag = 'output window, operand 0']
    %12 = vsyncpa [#allocation3], 0
    %13 = vsyncpa [#allocation6], 0
    %14 = vsyncpa [#allocation4], 0
    %s15 = scalar_lea.sflag [#allocation4], 1
    %16 = vsyncpa %s15, 0
    loop: start=0, step=1, limit=4
    $region2: #{tpu_custom_call.1} parent=1 // loop_pre_header
      _
    $region3: #{tpu_custom_call.1} parent=1 // loop_header
      %s18 = sphi 0, %s22
      %p19 = scmp.ge.s32.totalorder %s18, 4
      %s28 = sphi 0, %s30
      %s31 = sphi 0, %s28
      %s32 = sphi 0, %s31
      %s48 = sphi 0, %s32
      %s52 = sphi 0, %s52
      %s54 = sphi 0, %s52
      %s55 = sphi 0, %s54
      %s69 = sphi 0, %s55
      %s73 = sphi 0, %s73
      %s75 = sphi 0, %s73
      %s76 = sphi 0, %s75
      %s90 = sphi 0, %s76
      %s94 = sphi 0, %s94
      %s96 = sphi 0, %s94
      %s97 = sphi 0, %s96
      %s111 = sphi 0, %s97
      %s115 = sphi 0, %s115
      %s117 = sphi 0, %s115
      %s118 = sphi 0, %s117
      %s132 = sphi 0, %s118
      %s136 = sphi 0, %s136
      %s138 = sphi 0, %s136
      %s139 = sphi 0, %s138
      %s153 = sphi 0, %s139
      %s157 = sphi 0, %s157
      %s159 = sphi 0, %s157
      %s160 = sphi 0, %s159
      %s174 = sphi 0, %s160
      %s180 = sphi 0, %s182
      %s183 = sphi 0, %s180
      %s184 = sphi 0, %s183
      %s200 = sphi 0, %s184
    $region4: #{tpu_custom_call.1} parent=1 // loop_header_branch
      %21 = sbr.rel (%p19) target = $region8
    $region5: #{tpu_custom_call.1} parent=1 // loop_body
      %s23 = ssub.s32 %s18, 1
      %s24 = ssub.s32 %s18, 2
      %s25 = sadd.s32 %s18, 1
      %s26 = ssub.s32 %s18, %s25
      %p27 = scmp.eq.s32.totalorder %s26, 0
      %s29 = sadd.s32 %s28, 1
      %s30 = scalar_select %p27, %s28, %s29
      %p33 = pneg %p27
      %p34 = scmp.eq.s32.totalorder %s18, 1
      %p35 = por %p33, %p34
      %p36 = scmp.ne.s32.totalorder %s28, %s31
      %p37 = scmp.eq.s32.totalorder %s18, 0
      %p38 = por %p36, %p37
      %p39 = scmp.ne.s32.totalorder %s28, %s31
      %p40 = scmp.eq.s32.totalorder %s23, 1
      %p41 = por %p39, %p40
      %p42 = scmp.ne.s32.totalorder %s31, %s32
      %p43 = scmp.eq.s32.totalorder %s23, 0
      %p44 = por %p42, %p43
      %p45 = scmp.ne.s32.totalorder %s31, %s32
      %p46 = scmp.eq.s32.totalorder %s24, 1
      %p47 = por %p45, %p46
      %p49 = scmp.ne.s32.totalorder %s32, %s48
      %p50 = scmp.eq.s32.totalorder %s24, 0
      %p51 = por %p49, %p50
      %s53 = sadd.s32 %s52, 1
      %p56 = scmp.eq.s32.totalorder %s18, 1
      %p57 = scmp.ne.s32.totalorder %s52, %s54
      %p58 = scmp.eq.s32.totalorder %s18, 0
      %p59 = por %p57, %p58
      %p60 = scmp.ne.s32.totalorder %s52, %s54
      %p61 = scmp.eq.s32.totalorder %s23, 1
      %p62 = por %p60, %p61
      %p63 = scmp.ne.s32.totalorder %s54, %s55
      %p64 = scmp.eq.s32.totalorder %s23, 0
      %p65 = por %p63, %p64
      %p66 = scmp.ne.s32.totalorder %s54, %s55
      %p67 = scmp.eq.s32.totalorder %s24, 1
      %p68 = por %p66, %p67
      %p70 = scmp.ne.s32.totalorder %s55, %s69
      %p71 = scmp.eq.s32.totalorder %s24, 0
      %p72 = por %p70, %p71
      %s74 = sadd.s32 %s73, 1
      %p77 = scmp.eq.s32.totalorder %s18, 1
      %p78 = scmp.ne.s32.totalorder %s73, %s75
      %p79 = scmp.eq.s32.totalorder %s18, 0
      %p80 = por %p78, %p79
      %p81 = scmp.ne.s32.totalorder %s73, %s75
      %p82 = scmp.eq.s32.totalorder %s23, 1
      %p83 = por %p81, %p82
      %p84 = scmp.ne.s32.totalorder %s75, %s76
      %p85 = scmp.eq.s32.totalorder %s23, 0
      %p86 = por %p84, %p85
      %p87 = scmp.ne.s32.totalorder %s75, %s76
      %p88 = scmp.eq.s32.totalorder %s24, 1
      %p89 = por %p87, %p88
      %p91 = scmp.ne.s32.totalorder %s76, %s90
      %p92 = scmp.eq.s32.totalorder %s24, 0
      %p93 = por %p91, %p92
      %s95 = sadd.s32 %s94, 1
      %p98 = scmp.eq.s32.totalorder %s18, 1
      %p99 = scmp.ne.s32.totalorder %s94, %s96
      %p100 = scmp.eq.s32.totalorder %s18, 0
      %p101 = por %p99, %p100
      %p102 = scmp.ne.s32.totalorder %s94, %s96
      %p103 = scmp.eq.s32.totalorder %s23, 1
      %p104 = por %p102, %p103
      %p105 = scmp.ne.s32.totalorder %s96, %s97
      %p106 = scmp.eq.s32.totalorder %s23, 0
      %p107 = por %p105, %p106
      %p108 = scmp.ne.s32.totalorder %s96, %s97
      %p109 = scmp.eq.s32.totalorder %s24, 1
      %p110 = por %p108, %p109
      %p112 = scmp.ne.s32.totalorder %s97, %s111
      %p113 = scmp.eq.s32.totalorder %s24, 0
      %p114 = por %p112, %p113
      %s116 = sadd.s32 %s115, 1
      %p119 = scmp.eq.s32.totalorder %s18, 1
      %p120 = scmp.ne.s32.totalorder %s115, %s117
      %p121 = scmp.eq.s32.totalorder %s18, 0
      %p122 = por %p120, %p121
      %p123 = scmp.ne.s32.totalorder %s115, %s117
      %p124 = scmp.eq.s32.totalorder %s23, 1
      %p125 = por %p123, %p124
      %p126 = scmp.ne.s32.totalorder %s117, %s118
      %p127 = scmp.eq.s32.totalorder %s23, 0
      %p128 = por %p126, %p127
      %p129 = scmp.ne.s32.totalorder %s117, %s118
      %p130 = scmp.eq.s32.totalorder %s24, 1
      %p131 = por %p129, %p130
      %p133 = scmp.ne.s32.totalorder %s118, %s132
      %p134 = scmp.eq.s32.totalorder %s24, 0
      %p135 = por %p133, %p134
      %s137 = sadd.s32 %s136, 1
      %p140 = scmp.eq.s32.totalorder %s18, 1
      %p141 = scmp.ne.s32.totalorder %s136, %s138
      %p142 = scmp.eq.s32.totalorder %s18, 0
      %p143 = por %p141, %p142
      %p144 = scmp.ne.s32.totalorder %s136, %s138
      %p145 = scmp.eq.s32.totalorder %s23, 1
      %p146 = por %p144, %p145
      %p147 = scmp.ne.s32.totalorder %s138, %s139
      %p148 = scmp.eq.s32.totalorder %s23, 0
      %p149 = por %p147, %p148
      %p150 = scmp.ne.s32.totalorder %s138, %s139
      %p151 = scmp.eq.s32.totalorder %s24, 1
      %p152 = por %p150, %p151
      %p154 = scmp.ne.s32.totalorder %s139, %s153
      %p155 = scmp.eq.s32.totalorder %s24, 0
      %p156 = por %p154, %p155
      %s158 = sadd.s32 %s157, 1
      %p161 = scmp.eq.s32.totalorder %s18, 1
      %p162 = scmp.ne.s32.totalorder %s157, %s159
      %p163 = scmp.eq.s32.totalorder %s18, 0
      %p164 = por %p162, %p163
      %p165 = scmp.ne.s32.totalorder %s157, %s159
      %p166 = scmp.eq.s32.totalorder %s23, 1
      %p167 = por %p165, %p166
      %p168 = scmp.ne.s32.totalorder %s159, %s160
      %p169 = scmp.eq.s32.totalorder %s23, 0
      %p170 = por %p168, %p169
      %p171 = scmp.ne.s32.totalorder %s159, %s160
      %p172 = scmp.eq.s32.totalorder %s24, 1
      %p173 = por %p171, %p172
      %p175 = scmp.ne.s32.totalorder %s160, %s174
      %p176 = scmp.eq.s32.totalorder %s24, 0
      %p177 = por %p175, %p176
      %s178 = ssub.s32 %s18, %s25
      %p179 = scmp.eq.s32.totalorder %s178, 0
      %s181 = sadd.s32 %s180, 1
      %s182 = scalar_select %p179, %s180, %s181
      %p185 = pneg %p179
      %p186 = scmp.eq.s32.totalorder %s18, 1
      %p187 = por %p185, %p186
      %p188 = scmp.ne.s32.totalorder %s180, %s183
      %p189 = scmp.eq.s32.totalorder %s18, 0
      %p190 = por %p188, %p189
      %p191 = scmp.ne.s32.totalorder %s180, %s183
      %p192 = scmp.eq.s32.totalorder %s23, 1
      %p193 = por %p191, %p192
      %p194 = scmp.ne.s32.totalorder %s183, %s184
      %p195 = scmp.eq.s32.totalorder %s23, 0
      %p196 = por %p194, %p195
      %p197 = scmp.ne.s32.totalorder %s183, %s184
      %p198 = scmp.eq.s32.totalorder %s24, 1
      %p199 = por %p197, %p198
      %p201 = scmp.ne.s32.totalorder %s184, %s200
      %p202 = scmp.eq.s32.totalorder %s24, 0
      %p203 = por %p201, %p202
      %p204 = scmp.le.s32.totalorder 1, %s18
      %p205 = scmp.lt.s32.totalorder %s18, 3
      %p206 = pnand %p204, %p205
      %p207 = pneg %p206
      // Predicated region
      $region9: #{tpu_custom_call.1} parent=5 // pred_check
        _
      $region10: #{tpu_custom_call.1} parent=5 // pred_check_branch
        %209 = sbr.rel (%p206) target = $region12
      $region11: #{tpu_custom_call.1} parent=5 // pred_region
        %s210 = ssub.s32 %s18, 1
        // Predicated region
        $region13: #{tpu_custom_call.1} parent=11 // pred_check
          %p211 = pneg %p65
        $region14: #{tpu_custom_call.1} parent=11 // pred_check_branch
          %213 = sbr.rel (%p211) target = $region16
        $region15: #{tpu_custom_call.1} parent=11 // pred_region
          _
        $region16: #{tpu_custom_call.1} parent=11 // pred_fallthru
          _
        // Predicated region
        $region17: #{tpu_custom_call.1} parent=11 // pred_check
          %p214 = pneg %p86
        $region18: #{tpu_custom_call.1} parent=11 // pred_check_branch
          %216 = sbr.rel (%p214) target = $region20
        $region19: #{tpu_custom_call.1} parent=11 // pred_region
          _
        $region20: #{tpu_custom_call.1} parent=11 // pred_fallthru
          _
        // Predicated region
        $region21: #{tpu_custom_call.1} parent=11 // pred_check
          %p217 = pneg %p107
        $region22: #{tpu_custom_call.1} parent=11 // pred_check_branch
          %219 = sbr.rel (%p217) target = $region24
        $region23: #{tpu_custom_call.1} parent=11 // pred_region
          %221 = vsyncadd [#allocation3], 0
          %s222 = sshll.u32 %s3, 4
          %s223 = int_to_ptr.hbm [resolvable:$true] %s222
          %s224 = sshll.u32 [#allocation2], 4
          %s225 = int_to_ptr.vmem [resolvable:$true] %s224
          %230 = dma.hbm_to_vmem [thread:$0]  %s223, 1536, %s225, [#allocation3], 64, 64, 4
        $region24: #{tpu_custom_call.1} parent=11 // pred_fallthru
          _
        // Predicated region
        $region25: #{tpu_custom_call.1} parent=11 // pred_check
          %p231 = pneg %p128
        $region26: #{tpu_custom_call.1} parent=11 // pred_check_branch
          %233 = sbr.rel (%p231) target = $region28
        $region27: #{tpu_custom_call.1} parent=11 // pred_region
          _
        $region28: #{tpu_custom_call.1} parent=11 // pred_fallthru
          _
        // Predicated region
        $region29: #{tpu_custom_call.1} parent=11 // pred_check
          %p234 = pneg %p149
        $region30: #{tpu_custom_call.1} parent=11 // pred_check_branch
          %236 = sbr.rel (%p234) target = $region32
        $region31: #{tpu_custom_call.1} parent=11 // pred_region
          %238 = vsyncadd [#allocation6], 0
          %s239 = sshll.u32 %s5, 4
          %s240 = int_to_ptr.hbm [resolvable:$true] %s239
          %s241 = sshll.u32 [#allocation5], 4
          %s242 = int_to_ptr.vmem [resolvable:$true] %s241
          %247 = dma.hbm_to_vmem [thread:$0]  %s240, 2048, %s242, [#allocation6], 64, 64, 4
        $region32: #{tpu_custom_call.1} parent=11 // pred_fallthru
          _
        // Predicated region
        $region33: #{tpu_custom_call.1} parent=11 // pred_check
          %p248 = pneg %p170
        $region34: #{tpu_custom_call.1} parent=11 // pred_check_branch
          %250 = sbr.rel (%p248) target = $region36
        $region35: #{tpu_custom_call.1} parent=11 // pred_region
          _
        $region36: #{tpu_custom_call.1} parent=11 // pred_fallthru
          _
      $region12: #{tpu_custom_call.1} parent=5 // pred_fallthru
        _
      %p251 = scmp.lt.s32.totalorder %s18, 2
      // Predicated region
      $region37: #{tpu_custom_call.1} parent=5 // pred_check
        %p252 = pneg %p251
      $region38: #{tpu_custom_call.1} parent=5 // pred_check_branch
        %254 = sbr.rel (%p252) target = $region40
      $region39: #{tpu_custom_call.1} parent=5 // pred_region
        // Predicated region
        $region41: #{tpu_custom_call.1} parent=39 // pred_check
          %p255 = pneg %p38
        $region42: #{tpu_custom_call.1} parent=39 // pred_check_branch
          %257 = sbr.rel (%p255) target = $region44
        $region43: #{tpu_custom_call.1} parent=39 // pred_region
          %s258 = smul.u32 8, %s18
          %p259 = scmp.lt.s32.totalorder %s258, 15
          %s260 = scalar_select %p259, %s258, 15
          %s261 = smul.addr %s260, 4
          %s262 = scalar_lea.vmem %s0, %s261
          %s263 = smul.u32 8, %s18
        $region44: #{tpu_custom_call.1} parent=39 // pred_fallthru
          _
      $region40: #{tpu_custom_call.1} parent=5 // pred_fallthru
        _
      %p264 = scmp.le.s32.totalorder 1, %s18
      %p265 = scmp.lt.s32.totalorder %s18, 3
      %p266 = pnand %p264, %p265
      %p267 = pneg %p266
      // Predicated region
      $region45: #{tpu_custom_call.1} parent=5 // pred_check
        _
      $region46: #{tpu_custom_call.1} parent=5 // pred_check_branch
        %269 = sbr.rel (%p266) target = $region48
      $region47: #{tpu_custom_call.1} parent=5 // pred_region
        %s270 = ssub.s32 %s18, 1
        // Predicated region
        $region49: #{tpu_custom_call.1} parent=47 // pred_check
          %p271 = pneg %p107
        $region50: #{tpu_custom_call.1} parent=47 // pred_check_branch
          %273 = sbr.rel (%p271) target = $region52
        $region51: #{tpu_custom_call.1} parent=47 // pred_region
          %275 = dma.done [#allocation3], 1536
        $region52: #{tpu_custom_call.1} parent=47 // pred_fallthru
          _
        // Predicated region
        $region53: #{tpu_custom_call.1} parent=47 // pred_check
          %p276 = pneg %p149
        $region54: #{tpu_custom_call.1} parent=47 // pred_check_branch
          %278 = sbr.rel (%p276) target = $region56
        $region55: #{tpu_custom_call.1} parent=47 // pred_region
          %280 = dma.done [#allocation6], 2048
        $region56: #{tpu_custom_call.1} parent=47 // pred_fallthru
          _
        %s281 = smul.u32 8, %s23
        %p282 = scmp.lt.s32.totalorder %s281, 15
        %s283 = scalar_select %p282, %s281, 15
        %s284 = smul.addr %s283, 4
        %s285 = scalar_lea.vmem %s0, %s284
        %p286 = pneg %p44
        %p287 = pneg %p41
        %p288 = pneg %p65
        %p289 = pneg %p62
        %p290 = pneg %p86
        %p291 = pneg %p83
        %p292 = pneg %p107
        %p293 = pneg %p104
        %p294 = pneg %p128
        %p295 = pneg %p125
        %p296 = pneg %p149
        %p297 = pneg %p146
        %p298 = pneg %p170
        %p299 = pneg %p167
        %p300 = pneg %p196
        %p301 = pneg %p193
        %s302 = sand.u32 %s183, 1
        %s303 = scalar_lea.sflag [#allocation4], %s302
        %s304 = sand.u32 %s183, 1
        %s305 = smul.addr %s304, 8
        %s306 = scalar_lea.vmem [#allocation7], %s305
        %s307 = smul.u32 8, %s23
        %p308 = scmp.lt.s32.totalorder %s307, 15
        %s309 = scalar_select %p308, %s307, 15
        %s310 = smul.addr %s309, 4
        %s311 = scalar_lea.vmem %s0, %s310
        %s312 = smul.u32 8, %s23
        %v314 = vld [vmem:[%s311] sm:$0xf]
        %v315 = vld [vmem:[%s311 + $0x4] sm:$0xf]
        %v316 = vld [vmem:[%s311 + $0x8] sm:$0xf]
        %v317 = vld [vmem:[%s311 + $0xc] sm:$0xf]
        %v318 = vld [vmem:[%s311 + $0x10] sm:$0xf]
        %v319 = vld [vmem:[%s311 + $0x14] sm:$0xf]
        %v320 = vld [vmem:[%s311 + $0x18] sm:$0xf]
        %v321 = vld [vmem:[%s311 + $0x1c] sm:$0xf]
        %v322 = vunpack.c.l.bf16 %v314
        %v323 = vunpack.c.l.bf16 %v315
        %v324 = vunpack.c.l.bf16 %v316
        %v325 = vunpack.c.l.bf16 %v317
        %v326 = vunpack.c.l.bf16 %v318
        %v327 = vunpack.c.l.bf16 %v319
        %v328 = vunpack.c.l.bf16 %v320
        %v329 = vunpack.c.l.bf16 %v321
        %v330 = vld [vmem:[%s1] sm:$0xf]
        %v331 = vld [vmem:[%s1 + $0x4] sm:$0x3]
        %v332 = vld [vmem:[%s2] sm:$0x1]
        %v333 = vlaneseq
        %v334 = vshrl.u32 %v333, 7
        %v335 = vadd.s32 %v334, 8
        %v336 = vadd.s32 %v334, 16
        %v337 = vadd.s32 %v334, 24
        %v338 = vadd.s32 %v334, 32
        %v339 = vadd.s32 %v334, 40
        %v340 = vadd.s32 %v334, 48
        %v341 = vadd.s32 %v334, 56
        %vm342 = vcmp.lt.s32.totalorder %v334, 0
        %v343 = vsub.s32 0, %v334
        %v344 = vsel %vm342, %v343, %v334
        %v345 = vshrl.u32 %v344, 3
        %v346 = vand.u32 %v344, 7
        %v347 = vsub.s32 0, %v346
        %v348 = vsel %vm342, %v347, %v346
        %vm349 = vcmp.lt.s32.totalorder %v335, 0
        %v350 = vsub.s32 0, %v335
        %v351 = vsel %vm349, %v350, %v335
        %v352 = vshrl.u32 %v351, 3
        %v353 = vand.u32 %v351, 7
        %v354 = vsub.s32 0, %v353
        %v355 = vsel %vm349, %v354, %v353
        %vm356 = vcmp.lt.s32.totalorder %v336, 0
        %v357 = vsub.s32 0, %v336
        %v358 = vsel %vm356, %v357, %v336
        %v359 = vshrl.u32 %v358, 3
        %v360 = vand.u32 %v358, 7
        %v361 = vsub.s32 0, %v360
        %v362 = vsel %vm356, %v361, %v360
        %vm363 = vcmp.lt.s32.totalorder %v337, 0
        %v364 = vsub.s32 0, %v337
        %v365 = vsel %vm363, %v364, %v337
        %v366 = vshrl.u32 %v365, 3
        %v367 = vand.u32 %v365, 7
        %v368 = vsub.s32 0, %v367
        %v369 = vsel %vm363, %v368, %v367
        %vm370 = vcmp.lt.s32.totalorder %v338, 0
        %v371 = vsub.s32 0, %v338
        %v372 = vsel %vm370, %v371, %v338
        %v373 = vshrl.u32 %v372, 3
        %v374 = vand.u32 %v372, 7
        %v375 = vsub.s32 0, %v374
        %v376 = vsel %vm370, %v375, %v374
        %vm377 = vcmp.lt.s32.totalorder %v339, 0
        %v378 = vsub.s32 0, %v339
        %v379 = vsel %vm377, %v378, %v339
        %v380 = vshrl.u32 %v379, 3
        %v381 = vand.u32 %v379, 7
        %v382 = vsub.s32 0, %v381
        %v383 = vsel %vm377, %v382, %v381
        %vm384 = vcmp.lt.s32.totalorder %v340, 0
        %v385 = vsub.s32 0, %v340
        %v386 = vsel %vm384, %v385, %v340
        %v387 = vshrl.u32 %v386, 3
        %v388 = vand.u32 %v386, 7
        %v389 = vsub.s32 0, %v388
        %v390 = vsel %vm384, %v389, %v388
        %vm391 = vcmp.lt.s32.totalorder %v341, 0
        %v392 = vsub.s32 0, %v341
        %v393 = vsel %vm391, %v392, %v341
        %v394 = vshrl.u32 %v393, 3
        %v395 = vand.u32 %v393, 7
        %v396 = vsub.s32 0, %v395
        %v397 = vsel %vm391, %v396, %v395
        %vm398 = vcmp.ne.s32.totalorder %v348, 0
        %vm399 = vcmp.ne.s32.totalorder %v355, 0
        %vm400 = vcmp.ne.s32.totalorder %v362, 0
        %vm401 = vcmp.ne.s32.totalorder %v369, 0
        %vm402 = vcmp.ne.s32.totalorder %v376, 0
        %vm403 = vcmp.ne.s32.totalorder %v383, 0
        %vm404 = vcmp.ne.s32.totalorder %v390, 0
        %vm405 = vcmp.ne.s32.totalorder %v397, 0
        %vm406 = vcmp.lt.s32.totalorder %v348, 0
        %vm407 = vcmp.lt.s32.totalorder %v355, 0
        %vm408 = vcmp.lt.s32.totalorder %v362, 0
        %vm409 = vcmp.lt.s32.totalorder %v369, 0
        %vm410 = vcmp.lt.s32.totalorder %v376, 0
        %vm411 = vcmp.lt.s32.totalorder %v383, 0
        %vm412 = vcmp.lt.s32.totalorder %v390, 0
        %vm413 = vcmp.lt.s32.totalorder %v397, 0
        %vm414 = vmand %vm406, %vm398
        %vm415 = vmand %vm407, %vm399
        %vm416 = vmand %vm408, %vm400
        %vm417 = vmand %vm409, %vm401
        %vm418 = vmand %vm410, %vm402
        %vm419 = vmand %vm411, %vm403
        %vm420 = vmand %vm412, %vm404
        %vm421 = vmand %vm413, %vm405
        %v422 = vadd.s32 %v348, 8
        %v423 = vadd.s32 %v355, 8
        %v424 = vadd.s32 %v362, 8
        %v425 = vadd.s32 %v369, 8
        %v426 = vadd.s32 %v376, 8
        %v427 = vadd.s32 %v383, 8
        %v428 = vadd.s32 %v390, 8
        %v429 = vadd.s32 %v397, 8
        %v430 = vsel %vm414, %v422, %v348
        %v431 = vsel %vm415, %v423, %v355
        %v432 = vsel %vm416, %v424, %v362
        %v433 = vsel %vm417, %v425, %v369
        %v434 = vsel %vm418, %v426, %v376
        %v435 = vsel %vm419, %v427, %v383
        %v436 = vsel %vm420, %v428, %v390
        %v437 = vsel %vm421, %v429, %v397
        %vm438 = vcmp.eq.s32.totalorder %v430, 0
        %vm439 = vcmp.eq.s32.totalorder %v431, 0
        %vm440 = vcmp.eq.s32.totalorder %v432, 0
        %vm441 = vcmp.eq.s32.totalorder %v433, 0
        %vm442 = vcmp.eq.s32.totalorder %v434, 0
        %vm443 = vcmp.eq.s32.totalorder %v435, 0
        %vm444 = vcmp.eq.s32.totalorder %v436, 0
        %vm445 = vcmp.eq.s32.totalorder %v437, 0
        %v446 = vrot.slane %v322, 7
        %v447 = vrot.slane %v323, 7
        %v448 = vrot.slane %v324, 7
        %v449 = vrot.slane %v325, 7
        %v450 = vrot.slane %v326, 7
        %v451 = vrot.slane %v327, 7
        %v452 = vrot.slane %v328, 7
        %v453 = vrot.slane %v329, 7
        %vm454 = vcmp.lt.s32.totalorder %v334, 1
        %v455 = vsel %vm454, %v452, %v453
        %v456 = vsel %vm454, %v451, %v452
        %v457 = vsel %vm454, %v450, %v451
        %v458 = vsel %vm454, %v449, %v450
        %v459 = vsel %vm454, %v448, %v449
        %v460 = vsel %vm454, %v447, %v448
        %v461 = vsel %vm454, %v446, %v447
        %v462 = vsel %vm454, %v453, %v446
        %v463 = vsel %vm438, 1, 0
        %v464 = vsel %vm439, 1, 0
        %v465 = vsel %vm440, 1, 0
        %v466 = vsel %vm441, 1, 0
        %v467 = vsel %vm442, 1, 0
        %v468 = vsel %vm443, 1, 0
        %v469 = vsel %vm444, 1, 0
        %v470 = vsel %vm445, 1, 0
        %vm471 = vcmp.eq.s32.totalorder %v463, 1
        %vm472 = vcmp.eq.s32.totalorder %v464, 1
        %vm473 = vcmp.eq.s32.totalorder %v465, 1
        %vm474 = vcmp.eq.s32.totalorder %v466, 1
        %vm475 = vcmp.eq.s32.totalorder %v467, 1
        %vm476 = vcmp.eq.s32.totalorder %v468, 1
        %vm477 = vcmp.eq.s32.totalorder %v469, 1
        %vm478 = vcmp.eq.s32.totalorder %v470, 1
        %v479 = vsel %vm471, 0.0, %v462
        %v480 = vsel %vm472, 0.0, %v461
        %v481 = vsel %vm473, 0.0, %v460
        %v482 = vsel %vm474, 0.0, %v459
        %v483 = vsel %vm475, 0.0, %v458
        %v484 = vsel %vm476, 0.0, %v457
        %v485 = vsel %vm477, 0.0, %v456
        %v486 = vsel %vm478, 0.0, %v455
        %vm487 = vcmp.eq.s32.totalorder %v430, 7
        %vm488 = vcmp.eq.s32.totalorder %v431, 7
        %vm489 = vcmp.eq.s32.totalorder %v432, 7
        %vm490 = vcmp.eq.s32.totalorder %v433, 7
        %vm491 = vcmp.eq.s32.totalorder %v434, 7
        %vm492 = vcmp.eq.s32.totalorder %v435, 7
        %vm493 = vcmp.eq.s32.totalorder %v436, 7
        %vm494 = vcmp.eq.s32.totalorder %v437, 7
        %v495 = vrot.slane %v322, 1
        %v496 = vrot.slane %v323, 1
        %v497 = vrot.slane %v324, 1
        %v498 = vrot.slane %v325, 1
        %v499 = vrot.slane %v326, 1
        %v500 = vrot.slane %v327, 1
        %v501 = vrot.slane %v328, 1
        %v502 = vrot.slane %v329, 1
        %vm503 = vcmp.lt.s32.totalorder %v334, 7
        %v504 = vsel %vm503, %v501, %v502
        %v505 = vsel %vm503, %v500, %v501
        %v506 = vsel %vm503, %v499, %v500
        %v507 = vsel %vm503, %v498, %v499
        %v508 = vsel %vm503, %v497, %v498
        %v509 = vsel %vm503, %v496, %v497
        %v510 = vsel %vm503, %v495, %v496
        %v511 = vsel %vm503, %v502, %v495
        %v512 = vsel %vm487, 1, 0
        %v513 = vsel %vm488, 1, 0
        %v514 = vsel %vm489, 1, 0
        %v515 = vsel %vm490, 1, 0
        %v516 = vsel %vm491, 1, 0
        %v517 = vsel %vm492, 1, 0
        %v518 = vsel %vm493, 1, 0
        %v519 = vsel %vm494, 1, 0
        %vm520 = vcmp.eq.s32.totalorder %v512, 1
        %vm521 = vcmp.eq.s32.totalorder %v513, 1
        %vm522 = vcmp.eq.s32.totalorder %v514, 1
        %vm523 = vcmp.eq.s32.totalorder %v515, 1
        %vm524 = vcmp.eq.s32.totalorder %v516, 1
        %vm525 = vcmp.eq.s32.totalorder %v517, 1
        %vm526 = vcmp.eq.s32.totalorder %v518, 1
        %vm527 = vcmp.eq.s32.totalorder %v519, 1
        %v528 = vsel %vm520, 0.0, %v510
        %v529 = vsel %vm521, 0.0, %v509
        %v530 = vsel %vm522, 0.0, %v508
        %v531 = vsel %vm523, 0.0, %v507
        %v532 = vsel %vm524, 0.0, %v506
        %v533 = vsel %vm525, 0.0, %v505
        %v534 = vsel %vm526, 0.0, %v504
        %v535 = vsel %vm527, 0.0, %v511
        %v536 = vpack.c.bf16 %v479, %v479
        %v537 = vpack.c.bf16 %v480, %v480
        %v538 = vpack.c.bf16 %v481, %v481
        %v539 = vpack.c.bf16 %v482, %v482
        %v540 = vpack.c.bf16 %v483, %v483
        %v541 = vpack.c.bf16 %v484, %v484
        %v542 = vpack.c.bf16 %v485, %v485
        %v543 = vpack.c.bf16 %v486, %v486
        %v544 = vpack.c.bf16 %v322, %v322
        %v545 = vpack.c.bf16 %v323, %v323
        %v546 = vpack.c.bf16 %v324, %v324
        %v547 = vpack.c.bf16 %v325, %v325
        %v548 = vpack.c.bf16 %v326, %v326
        %v549 = vpack.c.bf16 %v327, %v327
        %v550 = vpack.c.bf16 %v328, %v328
        %v551 = vpack.c.bf16 %v329, %v329
        %v552 = vpack.c.bf16 %v528, %v528
        %v553 = vpack.c.bf16 %v529, %v529
        %v554 = vpack.c.bf16 %v530, %v530
        %v555 = vpack.c.bf16 %v531, %v531
        %v556 = vpack.c.bf16 %v532, %v532
        %v557 = vpack.c.bf16 %v533, %v533
        %v558 = vpack.c.bf16 %v534, %v534
        %v559 = vpack.c.bf16 %v535, %v535
        %v568 = vunpack.c.l.b16 %v536
        %v569 = vunpack.c.l.b16 %v537
        %v570 = vunpack.c.l.b16 %v538
        %v571 = vunpack.c.l.b16 %v539
        %v572 = vunpack.c.l.b16 %v540
        %v573 = vunpack.c.l.b16 %v541
        %v574 = vunpack.c.l.b16 %v542
        %v575 = vunpack.c.l.b16 %v543
        %v576 = vpack.c.b16 %v569, %v568
        %v577 = vpack.c.b16 %v571, %v570
        %v578 = vpack.c.b16 %v573, %v572
        %v579 = vpack.c.b16 %v575, %v574
        %v588 = vunpack.c.l.b16 %v544
        %v589 = vunpack.c.l.b16 %v545
        %v590 = vunpack.c.l.b16 %v546
        %v591 = vunpack.c.l.b16 %v547
        %v592 = vunpack.c.l.b16 %v548
        %v593 = vunpack.c.l.b16 %v549
        %v594 = vunpack.c.l.b16 %v550
        %v595 = vunpack.c.l.b16 %v551
        %v596 = vpack.c.b16 %v589, %v588
        %v597 = vpack.c.b16 %v591, %v590
        %v598 = vpack.c.b16 %v593, %v592
        %v599 = vpack.c.b16 %v595, %v594
        %600 = vrot.lane.b32.xlu0 %v596, 4
        %v601 = vpop.permute.xlu0 %600
        %602 = vrot.lane.b32.xlu0 %v597, 4
        %v603 = vpop.permute.xlu0 %602
        %604 = vrot.lane.b32.xlu0 %v598, 4
        %v605 = vpop.permute.xlu0 %604
        %606 = vrot.lane.b32.xlu0 %v599, 4
        %v607 = vpop.permute.xlu0 %606
        %v616 = vunpack.c.l.b16 %v552
        %v617 = vunpack.c.l.b16 %v553
        %v618 = vunpack.c.l.b16 %v554
        %v619 = vunpack.c.l.b16 %v555
        %v620 = vunpack.c.l.b16 %v556
        %v621 = vunpack.c.l.b16 %v557
        %v622 = vunpack.c.l.b16 %v558
        %v623 = vunpack.c.l.b16 %v559
        %v624 = vpack.c.b16 %v617, %v616
        %v625 = vpack.c.b16 %v619, %v618
        %v626 = vpack.c.b16 %v621, %v620
        %v627 = vpack.c.b16 %v623, %v622
        %628 = vrot.lane.b32.xlu0 %v624, 8
        %v629 = vpop.permute.xlu0 %628
        %630 = vrot.lane.b32.xlu0 %v625, 8
        %v631 = vpop.permute.xlu0 %630
        %632 = vrot.lane.b32.xlu0 %v626, 8
        %v633 = vpop.permute.xlu0 %632
        %634 = vrot.lane.b32.xlu0 %v627, 8
        %v635 = vpop.permute.xlu0 %634
        %vm636 = vcmask 31744
        %v639 = vsel %vm636, %v576, %v601
        %v642 = vsel %vm636, %v577, %v603
        %v645 = vsel %vm636, %v578, %v605
        %v648 = vsel %vm636, %v579, %v607
        %vm649 = vcmask 64512
        %v651 = vsel %vm649, %v639, %v629
        %v653 = vsel %vm649, %v642, %v631
        %v655 = vsel %vm649, %v645, %v633
        %v657 = vsel %vm649, %v648, %v635
        %v659 = vperm.slane %v332, 0
        %v663 = vunpack.c.l.b16 %v330
        %v664 = vunpack.c.l.b16 %v331
        %v665 = vpack.c.b16 %v664, %v663
        %vm666 = vcmask 97280
        %v667 = vsel %vm666, %v651, 0
        %v669 = vsel %vm666, %v653, 0
        %v671 = vsel %vm666, %v655, 0
        %v673 = vsel %vm666, %v657, 0
        %vm675 = vcmask 1045504
        %v677 = vsel %vm675, %v665, 0
        %679 = vmatpush.bf16.msra.mxu0 0
        %680 = vmatpush.bf16.msra.mxu0 0
        %681 = vmatpush.bf16.msra.mxu0 0
        %682 = vmatpush.bf16.msra.mxu0 0
        %683 = vmatpush.bf16.msra.mxu0 0
        %684 = vmatpush.bf16.msra.mxu0 0
        %685 = vmatpush.bf16.msra.mxu0 0
        %686 = vmatpush.bf16.msra.mxu0 %v677
        %687 = vmatmul.bf16.gmra.mxu0 %v667
        %v688 = vpop.f32.mrf.mxu0
        %v689 = vadd.f32 %v659, %v688
        %v690 = vpop.f32.mrf.mxu0
        %v691 = vadd.f32 %v659, %v690
        %692 = vmatmul.bf16.gmra.mxu0 %v669
        %v693 = vpop.f32.mrf.mxu0
        %v694 = vadd.f32 %v659, %v693
        %v695 = vpop.f32.mrf.mxu0
        %v696 = vadd.f32 %v659, %v695
        %697 = vmatmul.bf16.gmra.mxu0 %v671
        %v698 = vpop.f32.mrf.mxu0
        %v699 = vadd.f32 %v659, %v698
        %v700 = vpop.f32.mrf.mxu0
        %v701 = vadd.f32 %v659, %v700
        %702 = vmatmul.bf16.gmra.mxu0 %v673
        %v703 = vpop.f32.mrf.mxu0
        %v704 = vadd.f32 %v659, %v703
        %v705 = vpop.f32.mrf.mxu0
        %v706 = vadd.f32 %v659, %v705
        %707 = vdwg.mxu0
        %v708 = vmax.f32 %v689, 0.0
        %v709 = vmax.f32 %v691, 0.0
        %v710 = vmax.f32 %v694, 0.0
        %v711 = vmax.f32 %v696, 0.0
        %v712 = vmax.f32 %v699, 0.0
        %v713 = vmax.f32 %v701, 0.0
        %v714 = vmax.f32 %v704, 0.0
        %v715 = vmax.f32 %v706, 0.0
        %v724 = vrot.slane %v708, 2
        %v725 = vrot.slane %v708, 4
        %v726 = vrot.slane %v708, 6
        %v727 = vrot.slane %v709, 2
        %v728 = vrot.slane %v709, 4
        %v729 = vrot.slane %v709, 6
        %v730 = vrot.slane %v710, 2
        %v731 = vrot.slane %v710, 4
        %v732 = vrot.slane %v710, 6
        %v733 = vrot.slane %v711, 2
        %v734 = vrot.slane %v711, 4
        %v735 = vrot.slane %v711, 6
        %v736 = vrot.slane %v712, 2
        %v737 = vrot.slane %v712, 4
        %v738 = vrot.slane %v712, 6
        %v739 = vrot.slane %v713, 2
        %v740 = vrot.slane %v713, 4
        %v741 = vrot.slane %v713, 6
        %v742 = vrot.slane %v714, 2
        %v743 = vrot.slane %v714, 4
        %v744 = vrot.slane %v714, 6
        %v745 = vrot.slane %v715, 2
        %v746 = vrot.slane %v715, 4
        %v747 = vrot.slane %v715, 6
        %vm772 = vcmask 517120
        %v773 = vsel %vm772, %v708, -inf
        %v774 = vrot.slane %v773, 4
        %v775 = vmax.f32 %v773, %v774
        %v776 = vrot.slane %v775, 2
        %v777 = vmax.f32 %v775, %v776
        %v778 = vrot.slane %v777, 1
        %v779 = vmax.f32 %v777, %v778
        %v780 = vsel %vm772, %v724, -inf
        %v781 = vrot.slane %v780, 4
        %v782 = vmax.f32 %v780, %v781
        %v783 = vrot.slane %v782, 2
        %v784 = vmax.f32 %v782, %v783
        %v785 = vrot.slane %v784, 1
        %v786 = vmax.f32 %v784, %v785
        %v787 = vsel %vm772, %v725, -inf
        %v788 = vrot.slane %v787, 4
        %v789 = vmax.f32 %v787, %v788
        %v790 = vrot.slane %v789, 2
        %v791 = vmax.f32 %v789, %v790
        %v792 = vrot.slane %v791, 1
        %v793 = vmax.f32 %v791, %v792
        %v794 = vsel %vm772, %v726, -inf
        %v795 = vrot.slane %v794, 4
        %v796 = vmax.f32 %v794, %v795
        %v797 = vrot.slane %v796, 2
        %v798 = vmax.f32 %v796, %v797
        %v799 = vrot.slane %v798, 1
        %v800 = vmax.f32 %v798, %v799
        %v801 = vsel %vm772, %v709, -inf
        %v802 = vrot.slane %v801, 4
        %v803 = vmax.f32 %v801, %v802
        %v804 = vrot.slane %v803, 2
        %v805 = vmax.f32 %v803, %v804
        %v806 = vrot.slane %v805, 1
        %v807 = vmax.f32 %v805, %v806
        %v808 = vsel %vm772, %v727, -inf
        %v809 = vrot.slane %v808, 4
        %v810 = vmax.f32 %v808, %v809
        %v811 = vrot.slane %v810, 2
        %v812 = vmax.f32 %v810, %v811
        %v813 = vrot.slane %v812, 1
        %v814 = vmax.f32 %v812, %v813
        %v815 = vsel %vm772, %v728, -inf
        %v816 = vrot.slane %v815, 4
        %v817 = vmax.f32 %v815, %v816
        %v818 = vrot.slane %v817, 2
        %v819 = vmax.f32 %v817, %v818
        %v820 = vrot.slane %v819, 1
        %v821 = vmax.f32 %v819, %v820
        %v822 = vsel %vm772, %v729, -inf
        %v823 = vrot.slane %v822, 4
        %v824 = vmax.f32 %v822, %v823
        %v825 = vrot.slane %v824, 2
        %v826 = vmax.f32 %v824, %v825
        %v827 = vrot.slane %v826, 1
        %v828 = vmax.f32 %v826, %v827
        %v829 = vsel %vm772, %v710, -inf
        %v830 = vrot.slane %v829, 4
        %v831 = vmax.f32 %v829, %v830
        %v832 = vrot.slane %v831, 2
        %v833 = vmax.f32 %v831, %v832
        %v834 = vrot.slane %v833, 1
        %v835 = vmax.f32 %v833, %v834
        %v836 = vsel %vm772, %v730, -inf
        %v837 = vrot.slane %v836, 4
        %v838 = vmax.f32 %v836, %v837
        %v839 = vrot.slane %v838, 2
        %v840 = vmax.f32 %v838, %v839
        %v841 = vrot.slane %v840, 1
        %v842 = vmax.f32 %v840, %v841
        %v843 = vsel %vm772, %v731, -inf
        %v844 = vrot.slane %v843, 4
        %v845 = vmax.f32 %v843, %v844
        %v846 = vrot.slane %v845, 2
        %v847 = vmax.f32 %v845, %v846
        %v848 = vrot.slane %v847, 1
        %v849 = vmax.f32 %v847, %v848
        %v850 = vsel %vm772, %v732, -inf
        %v851 = vrot.slane %v850, 4
        %v852 = vmax.f32 %v850, %v851
        %v853 = vrot.slane %v852, 2
        %v854 = vmax.f32 %v852, %v853
        %v855 = vrot.slane %v854, 1
        %v856 = vmax.f32 %v854, %v855
        %v857 = vsel %vm772, %v711, -inf
        %v858 = vrot.slane %v857, 4
        %v859 = vmax.f32 %v857, %v858
        %v860 = vrot.slane %v859, 2
        %v861 = vmax.f32 %v859, %v860
        %v862 = vrot.slane %v861, 1
        %v863 = vmax.f32 %v861, %v862
        %v864 = vsel %vm772, %v733, -inf
        %v865 = vrot.slane %v864, 4
        %v866 = vmax.f32 %v864, %v865
        %v867 = vrot.slane %v866, 2
        %v868 = vmax.f32 %v866, %v867
        %v869 = vrot.slane %v868, 1
        %v870 = vmax.f32 %v868, %v869
        %v871 = vsel %vm772, %v734, -inf
        %v872 = vrot.slane %v871, 4
        %v873 = vmax.f32 %v871, %v872
        %v874 = vrot.slane %v873, 2
        %v875 = vmax.f32 %v873, %v874
        %v876 = vrot.slane %v875, 1
        %v877 = vmax.f32 %v875, %v876
        %v878 = vsel %vm772, %v735, -inf
        %v879 = vrot.slane %v878, 4
        %v880 = vmax.f32 %v878, %v879
        %v881 = vrot.slane %v880, 2
        %v882 = vmax.f32 %v880, %v881
        %v883 = vrot.slane %v882, 1
        %v884 = vmax.f32 %v882, %v883
        %v885 = vsel %vm772, %v712, -inf
        %v886 = vrot.slane %v885, 4
        %v887 = vmax.f32 %v885, %v886
        %v888 = vrot.slane %v887, 2
        %v889 = vmax.f32 %v887, %v888
        %v890 = vrot.slane %v889, 1
        %v891 = vmax.f32 %v889, %v890
        %v892 = vsel %vm772, %v736, -inf
        %v893 = vrot.slane %v892, 4
        %v894 = vmax.f32 %v892, %v893
        %v895 = vrot.slane %v894, 2
        %v896 = vmax.f32 %v894, %v895
        %v897 = vrot.slane %v896, 1
        %v898 = vmax.f32 %v896, %v897
        %v899 = vsel %vm772, %v737, -inf
        %v900 = vrot.slane %v899, 4
        %v901 = vmax.f32 %v899, %v900
        %v902 = vrot.slane %v901, 2
        %v903 = vmax.f32 %v901, %v902
        %v904 = vrot.slane %v903, 1
        %v905 = vmax.f32 %v903, %v904
        %v906 = vsel %vm772, %v738, -inf
        %v907 = vrot.slane %v906, 4
        %v908 = vmax.f32 %v906, %v907
        %v909 = vrot.slane %v908, 2
        %v910 = vmax.f32 %v908, %v909
        %v911 = vrot.slane %v910, 1
        %v912 = vmax.f32 %v910, %v911
        %v913 = vsel %vm772, %v713, -inf
        %v914 = vrot.slane %v913, 4
        %v915 = vmax.f32 %v913, %v914
        %v916 = vrot.slane %v915, 2
        %v917 = vmax.f32 %v915, %v916
        %v918 = vrot.slane %v917, 1
        %v919 = vmax.f32 %v917, %v918
        %v920 = vsel %vm772, %v739, -inf
        %v921 = vrot.slane %v920, 4
        %v922 = vmax.f32 %v920, %v921
        %v923 = vrot.slane %v922, 2
        %v924 = vmax.f32 %v922, %v923
        %v925 = vrot.slane %v924, 1
        %v926 = vmax.f32 %v924, %v925
        %v927 = vsel %vm772, %v740, -inf
        %v928 = vrot.slane %v927, 4
        %v929 = vmax.f32 %v927, %v928
        %v930 = vrot.slane %v929, 2
        %v931 = vmax.f32 %v929, %v930
        %v932 = vrot.slane %v931, 1
        %v933 = vmax.f32 %v931, %v932
        %v934 = vsel %vm772, %v741, -inf
        %v935 = vrot.slane %v934, 4
        %v936 = vmax.f32 %v934, %v935
        %v937 = vrot.slane %v936, 2
        %v938 = vmax.f32 %v936, %v937
        %v939 = vrot.slane %v938, 1
        %v940 = vmax.f32 %v938, %v939
        %v941 = vsel %vm772, %v714, -inf
        %v942 = vrot.slane %v941, 4
        %v943 = vmax.f32 %v941, %v942
        %v944 = vrot.slane %v943, 2
        %v945 = vmax.f32 %v943, %v944
        %v946 = vrot.slane %v945, 1
        %v947 = vmax.f32 %v945, %v946
        %v948 = vsel %vm772, %v742, -inf
        %v949 = vrot.slane %v948, 4
        %v950 = vmax.f32 %v948, %v949
        %v951 = vrot.slane %v950, 2
        %v952 = vmax.f32 %v950, %v951
        %v953 = vrot.slane %v952, 1
        %v954 = vmax.f32 %v952, %v953
        %v955 = vsel %vm772, %v743, -inf
        %v956 = vrot.slane %v955, 4
        %v957 = vmax.f32 %v955, %v956
        %v958 = vrot.slane %v957, 2
        %v959 = vmax.f32 %v957, %v958
        %v960 = vrot.slane %v959, 1
        %v961 = vmax.f32 %v959, %v960
        %v962 = vsel %vm772, %v744, -inf
        %v963 = vrot.slane %v962, 4
        %v964 = vmax.f32 %v962, %v963
        %v965 = vrot.slane %v964, 2
        %v966 = vmax.f32 %v964, %v965
        %v967 = vrot.slane %v966, 1
        %v968 = vmax.f32 %v966, %v967
        %v969 = vsel %vm772, %v715, -inf
        %v970 = vrot.slane %v969, 4
        %v971 = vmax.f32 %v969, %v970
        %v972 = vrot.slane %v971, 2
        %v973 = vmax.f32 %v971, %v972
        %v974 = vrot.slane %v973, 1
        %v975 = vmax.f32 %v973, %v974
        %v976 = vsel %vm772, %v745, -inf
        %v977 = vrot.slane %v976, 4
        %v978 = vmax.f32 %v976, %v977
        %v979 = vrot.slane %v978, 2
        %v980 = vmax.f32 %v978, %v979
        %v981 = vrot.slane %v980, 1
        %v982 = vmax.f32 %v980, %v981
        %v983 = vsel %vm772, %v746, -inf
        %v984 = vrot.slane %v983, 4
        %v985 = vmax.f32 %v983, %v984
        %v986 = vrot.slane %v985, 2
        %v987 = vmax.f32 %v985, %v986
        %v988 = vrot.slane %v987, 1
        %v989 = vmax.f32 %v987, %v988
        %v990 = vsel %vm772, %v747, -inf
        %v991 = vrot.slane %v990, 4
        %v992 = vmax.f32 %v990, %v991
        %v993 = vrot.slane %v992, 2
        %v994 = vmax.f32 %v992, %v993
        %v995 = vrot.slane %v994, 1
        %v996 = vmax.f32 %v994, %v995
        %v997 = vld [vmem:[#allocation2] sm:$0xf]
        %v998 = vld [vmem:[#allocation2 + $0x4] sm:$0xf]
        %v999 = vld [vmem:[#allocation2 + $0x8] sm:$0xf]
        %v1000 = vld [vmem:[#allocation2 + $0xc] sm:$0xf]
        %v1001 = vld [vmem:[#allocation2 + $0x10] sm:$0xf]
        %v1002 = vld [vmem:[#allocation2 + $0x14] sm:$0xf]
        %v1003 = vld [vmem:[#allocation2 + $0x18] sm:$0xf]
        %v1004 = vld [vmem:[#allocation2 + $0x1c] sm:$0xf]
        %v1005 = vld [vmem:[#allocation2 + $0x20] sm:$0xf]
        %v1006 = vld [vmem:[#allocation2 + $0x24] sm:$0xf]
        %v1007 = vld [vmem:[#allocation2 + $0x28] sm:$0xf]
        %v1008 = vld [vmem:[#allocation2 + $0x2c] sm:$0xf]
        %v1009 = vld [vmem:[#allocation2 + $0x30] sm:$0xf]
        %v1010 = vld [vmem:[#allocation2 + $0x34] sm:$0xf]
        %v1011 = vld [vmem:[#allocation2 + $0x38] sm:$0xf]
        %v1012 = vld [vmem:[#allocation2 + $0x3c] sm:$0xf]
        %v1013 = vld [vmem:[#allocation2 + $0x40] sm:$0xf]
        %v1014 = vld [vmem:[#allocation2 + $0x44] sm:$0xf]
        %v1015 = vld [vmem:[#allocation2 + $0x48] sm:$0xf]
        %v1016 = vld [vmem:[#allocation2 + $0x4c] sm:$0xf]
        %v1017 = vld [vmem:[#allocation2 + $0x50] sm:$0xf]
        %v1018 = vld [vmem:[#allocation2 + $0x54] sm:$0xf]
        %v1019 = vld [vmem:[#allocation2 + $0x58] sm:$0xf]
        %v1020 = vld [vmem:[#allocation2 + $0x5c] sm:$0xf]
        %v1021 = vld [vmem:[%s4] sm:$0x1]
        %vm1022 = vcmp.lt.s32.totalorder %v334, 0
        %v1023 = vsub.s32 0, %v334
        %v1024 = vsel %vm1022, %v1023, %v334
        %v1025 = vshrl.u32 %v1024, 2
        %v1026 = vand.u32 %v1024, 3
        %v1027 = vsub.s32 0, %v1026
        %v1028 = vsel %vm1022, %v1027, %v1026
        %vm1029 = vcmp.lt.s32.totalorder %v335, 0
        %v1030 = vsub.s32 0, %v335
        %v1031 = vsel %vm1029, %v1030, %v335
        %v1032 = vshrl.u32 %v1031, 2
        %v1033 = vand.u32 %v1031, 3
        %v1034 = vsub.s32 0, %v1033
        %v1035 = vsel %vm1029, %v1034, %v1033
        %vm1036 = vcmp.lt.s32.totalorder %v336, 0
        %v1037 = vsub.s32 0, %v336
        %v1038 = vsel %vm1036, %v1037, %v336
        %v1039 = vshrl.u32 %v1038, 2
        %v1040 = vand.u32 %v1038, 3
        %v1041 = vsub.s32 0, %v1040
        %v1042 = vsel %vm1036, %v1041, %v1040
        %vm1043 = vcmp.lt.s32.totalorder %v337, 0
        %v1044 = vsub.s32 0, %v337
        %v1045 = vsel %vm1043, %v1044, %v337
        %v1046 = vshrl.u32 %v1045, 2
        %v1047 = vand.u32 %v1045, 3
        %v1048 = vsub.s32 0, %v1047
        %v1049 = vsel %vm1043, %v1048, %v1047
        %vm1050 = vcmp.ne.s32.totalorder %v1028, 0
        %vm1051 = vcmp.ne.s32.totalorder %v1035, 0
        %vm1052 = vcmp.ne.s32.totalorder %v1042, 0
        %vm1053 = vcmp.ne.s32.totalorder %v1049, 0
        %vm1054 = vcmp.lt.s32.totalorder %v1028, 0
        %vm1055 = vcmp.lt.s32.totalorder %v1035, 0
        %vm1056 = vcmp.lt.s32.totalorder %v1042, 0
        %vm1057 = vcmp.lt.s32.totalorder %v1049, 0
        %vm1058 = vmand %vm1054, %vm1050
        %vm1059 = vmand %vm1055, %vm1051
        %vm1060 = vmand %vm1056, %vm1052
        %vm1061 = vmand %vm1057, %vm1053
        %v1062 = vadd.s32 %v1028, 4
        %v1063 = vadd.s32 %v1035, 4
        %v1064 = vadd.s32 %v1042, 4
        %v1065 = vadd.s32 %v1049, 4
        %v1066 = vsel %vm1058, %v1062, %v1028
        %v1067 = vsel %vm1059, %v1063, %v1035
        %v1068 = vsel %vm1060, %v1064, %v1042
        %v1069 = vsel %vm1061, %v1065, %v1049
        %vm1070 = vcmp.eq.s32.totalorder %v1066, 0
        %vm1071 = vcmp.eq.s32.totalorder %v1067, 0
        %vm1072 = vcmp.eq.s32.totalorder %v1068, 0
        %vm1073 = vcmp.eq.s32.totalorder %v1069, 0
        %vm1106 = vcmask 1041409
        %v1107 = vsel %vm1106, %v786, %v779
        %vm1108 = vcmask 1042434
        %v1109 = vsel %vm1108, %v793, %v1107
        %vm1110 = vcmask 1043459
        %v1111 = vsel %vm1110, %v800, %v1109
        %vm1112 = vcmask 1044484
        %v1113 = vsel %vm1112, %v807, %v1111
        %vm1114 = vcmask 1045509
        %v1115 = vsel %vm1114, %v814, %v1113
        %vm1116 = vcmask 1046534
        %v1117 = vsel %vm1116, %v821, %v1115
        %vm1118 = vcmask 1047559
        %v1119 = vsel %vm1118, %v828, %v1117
        %v1120 = vsel %vm1106, %v842, %v835
        %v1121 = vsel %vm1108, %v849, %v1120
        %v1122 = vsel %vm1110, %v856, %v1121
        %v1123 = vsel %vm1112, %v863, %v1122
        %v1124 = vsel %vm1114, %v870, %v1123
        %v1125 = vsel %vm1116, %v877, %v1124
        %v1126 = vsel %vm1118, %v884, %v1125
        %v1127 = vsel %vm1106, %v898, %v891
        %v1128 = vsel %vm1108, %v905, %v1127
        %v1129 = vsel %vm1110, %v912, %v1128
        %v1130 = vsel %vm1112, %v919, %v1129
        %v1131 = vsel %vm1114, %v926, %v1130
        %v1132 = vsel %vm1116, %v933, %v1131
        %v1133 = vsel %vm1118, %v940, %v1132
        %v1134 = vsel %vm1106, %v954, %v947
        %v1135 = vsel %vm1108, %v961, %v1134
        %v1136 = vsel %vm1110, %v968, %v1135
        %v1137 = vsel %vm1112, %v975, %v1136
        %v1138 = vsel %vm1114, %v982, %v1137
        %v1139 = vsel %vm1116, %v989, %v1138
        %v1140 = vsel %vm1118, %v996, %v1139
        %v1145 = vrot.slane %v1119, 7
        %v1146 = vrot.slane %v1126, 7
        %v1147 = vrot.slane %v1133, 7
        %v1148 = vrot.slane %v1140, 7
        %v1149 = vsel %vm454, %v1147, %v1148
        %v1150 = vsel %vm454, %v1146, %v1147
        %v1151 = vsel %vm454, %v1145, %v1146
        %v1152 = vsel %vm454, %v1148, %v1145
        %v1153 = vsel %vm1070, 1, 0
        %v1154 = vsel %vm1071, 1, 0
        %v1155 = vsel %vm1072, 1, 0
        %v1156 = vsel %vm1073, 1, 0
        %vm1157 = vcmp.eq.s32.totalorder %v1153, 1
        %vm1158 = vcmp.eq.s32.totalorder %v1154, 1
        %vm1159 = vcmp.eq.s32.totalorder %v1155, 1
        %vm1160 = vcmp.eq.s32.totalorder %v1156, 1
        %v1161 = vsel %vm1157, 0.0, %v1152
        %v1162 = vsel %vm1158, 0.0, %v1151
        %v1163 = vsel %vm1159, 0.0, %v1150
        %v1164 = vsel %vm1160, 0.0, %v1149
        %vm1165 = vcmp.eq.s32.totalorder %v1066, 3
        %vm1166 = vcmp.eq.s32.totalorder %v1067, 3
        %vm1167 = vcmp.eq.s32.totalorder %v1068, 3
        %vm1168 = vcmp.eq.s32.totalorder %v1069, 3
        %v1169 = vrot.slane %v1119, 1
        %v1170 = vrot.slane %v1126, 1
        %v1171 = vrot.slane %v1133, 1
        %v1172 = vrot.slane %v1140, 1
        %v1173 = vsel %vm503, %v1171, %v1172
        %v1174 = vsel %vm503, %v1170, %v1171
        %v1175 = vsel %vm503, %v1169, %v1170
        %v1176 = vsel %vm503, %v1172, %v1169
        %v1177 = vsel %vm1165, 1, 0
        %v1178 = vsel %vm1166, 1, 0
        %v1179 = vsel %vm1167, 1, 0
        %v1180 = vsel %vm1168, 1, 0
        %vm1181 = vcmp.eq.s32.totalorder %v1177, 1
        %vm1182 = vcmp.eq.s32.totalorder %v1178, 1
        %vm1183 = vcmp.eq.s32.totalorder %v1179, 1
        %vm1184 = vcmp.eq.s32.totalorder %v1180, 1
        %v1185 = vsel %vm1181, 0.0, %v1175
        %v1186 = vsel %vm1182, 0.0, %v1174
        %v1187 = vsel %vm1183, 0.0, %v1173
        %v1188 = vsel %vm1184, 0.0, %v1176
        %v1189 = vpack.c.bf16 %v1161, %v1161
        %v1190 = vpack.c.bf16 %v1162, %v1162
        %v1191 = vpack.c.bf16 %v1163, %v1163
        %v1192 = vpack.c.bf16 %v1164, %v1164
        %v1193 = vpack.c.bf16 %v779, %v779
        %v1194 = vpack.c.bf16 %v786, %v786
        %v1195 = vpack.c.bf16 %v793, %v793
        %v1196 = vpack.c.bf16 %v800, %v800
        %v1197 = vpack.c.bf16 %v807, %v807
        %v1198 = vpack.c.bf16 %v814, %v814
        %v1199 = vpack.c.bf16 %v821, %v821
        %v1200 = vpack.c.bf16 %v828, %v828
        %v1201 = vpack.c.bf16 %v835, %v835
        %v1202 = vpack.c.bf16 %v842, %v842
        %v1203 = vpack.c.bf16 %v849, %v849
        %v1204 = vpack.c.bf16 %v856, %v856
        %v1205 = vpack.c.bf16 %v863, %v863
        %v1206 = vpack.c.bf16 %v870, %v870
        %v1207 = vpack.c.bf16 %v877, %v877
        %v1208 = vpack.c.bf16 %v884, %v884
        %v1209 = vpack.c.bf16 %v891, %v891
        %v1210 = vpack.c.bf16 %v898, %v898
        %v1211 = vpack.c.bf16 %v905, %v905
        %v1212 = vpack.c.bf16 %v912, %v912
        %v1213 = vpack.c.bf16 %v919, %v919
        %v1214 = vpack.c.bf16 %v926, %v926
        %v1215 = vpack.c.bf16 %v933, %v933
        %v1216 = vpack.c.bf16 %v940, %v940
        %v1217 = vpack.c.bf16 %v947, %v947
        %v1218 = vpack.c.bf16 %v954, %v954
        %v1219 = vpack.c.bf16 %v961, %v961
        %v1220 = vpack.c.bf16 %v968, %v968
        %v1221 = vpack.c.bf16 %v975, %v975
        %v1222 = vpack.c.bf16 %v982, %v982
        %v1223 = vpack.c.bf16 %v989, %v989
        %v1224 = vpack.c.bf16 %v996, %v996
        %v1225 = vpack.c.bf16 %v1185, %v1185
        %v1226 = vpack.c.bf16 %v1186, %v1186
        %v1227 = vpack.c.bf16 %v1187, %v1187
        %v1228 = vpack.c.bf16 %v1188, %v1188
        %v1233 = vunpack.c.l.b16 %v1189
        %v1234 = vunpack.c.l.b16 %v1190
        %v1235 = vunpack.c.l.b16 %v1191
        %v1236 = vunpack.c.l.b16 %v1192
        %v1237 = vpack.c.b16 %v1234, %v1233
        %v1238 = vpack.c.b16 %v1236, %v1235
        %v1271 = vperm.slane %v1193, 0
        %v1272 = vperm.slane %v1194, 0
        %v1273 = vperm.slane %v1195, 0
        %v1274 = vperm.slane %v1196, 0
        %v1275 = vperm.slane %v1197, 0
        %v1276 = vperm.slane %v1198, 0
        %v1277 = vperm.slane %v1199, 0
        %v1278 = vperm.slane %v1200, 0
        %v1279 = vperm.slane %v1201, 0
        %v1280 = vperm.slane %v1202, 0
        %v1281 = vperm.slane %v1203, 0
        %v1282 = vperm.slane %v1204, 0
        %v1283 = vperm.slane %v1205, 0
        %v1284 = vperm.slane %v1206, 0
        %v1285 = vperm.slane %v1207, 0
        %v1286 = vperm.slane %v1208, 0
        %v1287 = vperm.slane %v1209, 0
        %v1288 = vperm.slane %v1210, 0
        %v1289 = vperm.slane %v1211, 0
        %v1290 = vperm.slane %v1212, 0
        %v1291 = vperm.slane %v1213, 0
        %v1292 = vperm.slane %v1214, 0
        %v1293 = vperm.slane %v1215, 0
        %v1294 = vperm.slane %v1216, 0
        %v1295 = vperm.slane %v1217, 0
        %v1296 = vperm.slane %v1218, 0
        %v1297 = vperm.slane %v1219, 0
        %v1298 = vperm.slane %v1220, 0
        %v1299 = vperm.slane %v1221, 0
        %v1300 = vperm.slane %v1222, 0
        %v1301 = vperm.slane %v1223, 0
        %v1302 = vperm.slane %v1224, 0
        %v1303 = vunpack.c.l.b16 %v1271
        %v1304 = vunpack.c.l.b16 %v1272
        %v1305 = vunpack.c.l.b16 %v1273
        %v1306 = vunpack.c.l.b16 %v1274
        %v1307 = vunpack.c.l.b16 %v1275
        %v1308 = vunpack.c.l.b16 %v1276
        %v1309 = vunpack.c.l.b16 %v1277
        %v1310 = vunpack.c.l.b16 %v1278
        %v1311 = vunpack.c.l.b16 %v1279
        %v1312 = vunpack.c.l.b16 %v1280
        %v1313 = vunpack.c.l.b16 %v1281
        %v1314 = vunpack.c.l.b16 %v1282
        %v1315 = vunpack.c.l.b16 %v1283
        %v1316 = vunpack.c.l.b16 %v1284
        %v1317 = vunpack.c.l.b16 %v1285
        %v1318 = vunpack.c.l.b16 %v1286
        %v1319 = vunpack.c.l.b16 %v1287
        %v1320 = vunpack.c.l.b16 %v1288
        %v1321 = vunpack.c.l.b16 %v1289
        %v1322 = vunpack.c.l.b16 %v1290
        %v1323 = vunpack.c.l.b16 %v1291
        %v1324 = vunpack.c.l.b16 %v1292
        %v1325 = vunpack.c.l.b16 %v1293
        %v1326 = vunpack.c.l.b16 %v1294
        %v1327 = vunpack.c.l.b16 %v1295
        %v1328 = vunpack.c.l.b16 %v1296
        %v1329 = vunpack.c.l.b16 %v1297
        %v1330 = vunpack.c.l.b16 %v1298
        %v1331 = vunpack.c.l.b16 %v1299
        %v1332 = vunpack.c.l.b16 %v1300
        %v1333 = vunpack.c.l.b16 %v1301
        %v1334 = vunpack.c.l.b16 %v1302
        %v1335 = vsel %vm1106, %v1304, %v1303
        %v1336 = vsel %vm1108, %v1305, %v1335
        %v1337 = vsel %vm1110, %v1306, %v1336
        %v1338 = vsel %vm1112, %v1307, %v1337
        %v1339 = vsel %vm1114, %v1308, %v1338
        %v1340 = vsel %vm1116, %v1309, %v1339
        %v1341 = vsel %vm1118, %v1310, %v1340
        %v1342 = vsel %vm1106, %v1312, %v1311
        %v1343 = vsel %vm1108, %v1313, %v1342
        %v1344 = vsel %vm1110, %v1314, %v1343
        %v1345 = vsel %vm1112, %v1315, %v1344
        %v1346 = vsel %vm1114, %v1316, %v1345
        %v1347 = vsel %vm1116, %v1317, %v1346
        %v1348 = vsel %vm1118, %v1318, %v1347
        %v1349 = vsel %vm1106, %v1320, %v1319
        %v1350 = vsel %vm1108, %v1321, %v1349
        %v1351 = vsel %vm1110, %v1322, %v1350
        %v1352 = vsel %vm1112, %v1323, %v1351
        %v1353 = vsel %vm1114, %v1324, %v1352
        %v1354 = vsel %vm1116, %v1325, %v1353
        %v1355 = vsel %vm1118, %v1326, %v1354
        %v1356 = vsel %vm1106, %v1328, %v1327
        %v1357 = vsel %vm1108, %v1329, %v1356
        %v1358 = vsel %vm1110, %v1330, %v1357
        %v1359 = vsel %vm1112, %v1331, %v1358
        %v1360 = vsel %vm1114, %v1332, %v1359
        %v1361 = vsel %vm1116, %v1333, %v1360
        %v1362 = vsel %vm1118, %v1334, %v1361
        %v1363 = vpack.c.b16 %v1348, %v1341
        %v1364 = vpack.c.b16 %v1362, %v1355
        %1365 = vrot.lane.b32.xlu0 %v1363, 64
        %v1366 = vpop.permute.xlu0 %1365
        %1367 = vrot.lane.b32.xlu0 %v1364, 64
        %v1368 = vpop.permute.xlu0 %1367
        %v1373 = vunpack.c.l.b16 %v1225
        %v1374 = vunpack.c.l.b16 %v1226
        %v1375 = vunpack.c.l.b16 %v1227
        %v1376 = vunpack.c.l.b16 %v1228
        %v1377 = vpack.c.b16 %v1374, %v1373
        %v1378 = vpack.c.b16 %v1376, %v1375
        %vm1379 = vcmask 523264
        %v1382 = vsel %vm1379, %v1237, %v1366
        %v1386 = vsel %vm1379, %v1238, %v1368
        %v1389 = vperm.slane %v1021, 0
        %v1415 = vunpack.c.l.b16 %v997
        %v1416 = vunpack.c.l.b16 %v998
        %v1417 = vunpack.c.l.b16 %v999
        %v1418 = vunpack.c.l.b16 %v1000
        %v1419 = vunpack.c.l.b16 %v1001
        %v1420 = vunpack.c.l.b16 %v1002
        %v1421 = vunpack.c.l.b16 %v1003
        %v1422 = vunpack.c.l.b16 %v1004
        %v1423 = vunpack.c.l.b16 %v1005
        %v1424 = vunpack.c.l.b16 %v1006
        %v1425 = vunpack.c.l.b16 %v1007
        %v1426 = vunpack.c.l.b16 %v1008
        %v1427 = vunpack.c.l.b16 %v1009
        %v1428 = vunpack.c.l.b16 %v1010
        %v1429 = vunpack.c.l.b16 %v1011
        %v1430 = vunpack.c.l.b16 %v1012
        %v1431 = vunpack.c.l.b16 %v1013
        %v1432 = vunpack.c.l.b16 %v1014
        %v1433 = vunpack.c.l.b16 %v1015
        %v1434 = vunpack.c.l.b16 %v1016
        %v1435 = vunpack.c.l.b16 %v1017
        %v1436 = vunpack.c.l.b16 %v1018
        %v1437 = vunpack.c.l.b16 %v1019
        %v1438 = vunpack.c.l.b16 %v1020
        %v1439 = vpack.c.b16 %v1416, %v1415
        %v1440 = vpack.c.b16 %v1418, %v1417
        %v1441 = vpack.c.b16 %v1420, %v1419
        %v1442 = vpack.c.b16 %v1422, %v1421
        %v1443 = vpack.c.b16 %v1424, %v1423
        %v1444 = vpack.c.b16 %v1426, %v1425
        %v1445 = vpack.c.b16 %v1428, %v1427
        %v1446 = vpack.c.b16 %v1430, %v1429
        %v1447 = vpack.c.b16 %v1432, %v1431
        %v1448 = vpack.c.b16 %v1434, %v1433
        %v1449 = vpack.c.b16 %v1436, %v1435
        %v1450 = vpack.c.b16 %v1438, %v1437
        %v1464 = vsel %vm1379, %v1377, 0
        %v1467 = vsel %vm1379, %v1378, 0
        %1469 = vmatpush.bf16.msra.mxu0 %v1446
        %1470 = vmatpush.bf16.msra.mxu0 %v1445
        %1471 = vmatpush.bf16.msra.mxu0 %v1444
        %1472 = vmatpush.bf16.msra.mxu0 %v1443
        %1473 = vmatpush.bf16.msra.mxu0 %v1442
        %1474 = vmatpush.bf16.msra.mxu0 %v1441
        %1475 = vmatpush.bf16.msra.mxu0 %v1440
        %1476 = vmatpush.bf16.msra.mxu0 %v1439
        %1477 = vmatmul.bf16.gmra.mxu0 %v1382
        %v1478 = vpop.f32.mrf.mxu0
        %v1479 = vadd.f32 %v1389, %v1478
        %v1480 = vpop.f32.mrf.mxu0
        %v1481 = vadd.f32 %v1389, %v1480
        %1482 = vmatmul.bf16.gmra.mxu0 %v1386
        %v1483 = vpop.f32.mrf.mxu0
        %v1484 = vadd.f32 %v1389, %v1483
        %v1485 = vpop.f32.mrf.mxu0
        %v1486 = vadd.f32 %v1389, %v1485
        %1487 = vdwg.mxu0
        %1488 = vmatpush.bf16.msra.mxu0 0
        %1489 = vmatpush.bf16.msra.mxu0 0
        %1490 = vmatpush.bf16.msra.mxu0 0
        %1491 = vmatpush.bf16.msra.mxu0 0
        %1492 = vmatpush.bf16.msra.mxu0 %v1450
        %1493 = vmatpush.bf16.msra.mxu0 %v1449
        %1494 = vmatpush.bf16.msra.mxu0 %v1448
        %1495 = vmatpush.bf16.msra.mxu0 %v1447
        %1496 = vmatmul.bf16.gmra.mxu0 %v1464
        %v1497 = vpop.f32.mrf.mxu0
        %v1498 = vadd.f32 %v1479, %v1497
        %v1499 = vpop.f32.mrf.mxu0
        %v1500 = vadd.f32 %v1481, %v1499
        %1501 = vmatmul.bf16.gmra.mxu0 %v1467
        %v1502 = vpop.f32.mrf.mxu0
        %v1503 = vadd.f32 %v1484, %v1502
        %v1504 = vpop.f32.mrf.mxu0
        %v1505 = vadd.f32 %v1486, %v1504
        %1506 = vdwg.mxu0
        %v1507 = vmax.f32 %v1498, 0.0
        %v1508 = vmax.f32 %v1500, 0.0
        %v1509 = vmax.f32 %v1503, 0.0
        %v1510 = vmax.f32 %v1505, 0.0
        %v1515 = vrot.slane %v1507, 2
        %v1516 = vrot.slane %v1507, 4
        %v1517 = vrot.slane %v1507, 6
        %v1518 = vrot.slane %v1508, 2
        %v1519 = vrot.slane %v1508, 4
        %v1520 = vrot.slane %v1508, 6
        %v1521 = vrot.slane %v1509, 2
        %v1522 = vrot.slane %v1509, 4
        %v1523 = vrot.slane %v1509, 6
        %v1524 = vrot.slane %v1510, 2
        %v1525 = vrot.slane %v1510, 4
        %v1526 = vrot.slane %v1510, 6
        %vm1539 = vcmask 1041408
        %v1540 = vsel %vm1539, %v1507, -inf
        %v1541 = vrot.slane %v1540, 4
        %v1542 = vmax.f32 %v1540, %v1541
        %v1543 = vrot.slane %v1542, 2
        %v1544 = vmax.f32 %v1542, %v1543
        %v1545 = vrot.slane %v1544, 1
        %v1546 = vmax.f32 %v1544, %v1545
        %v1547 = vsel %vm1539, %v1515, -inf
        %v1548 = vrot.slane %v1547, 4
        %v1549 = vmax.f32 %v1547, %v1548
        %v1550 = vrot.slane %v1549, 2
        %v1551 = vmax.f32 %v1549, %v1550
        %v1552 = vrot.slane %v1551, 1
        %v1553 = vmax.f32 %v1551, %v1552
        %v1554 = vsel %vm1539, %v1516, -inf
        %v1555 = vrot.slane %v1554, 4
        %v1556 = vmax.f32 %v1554, %v1555
        %v1557 = vrot.slane %v1556, 2
        %v1558 = vmax.f32 %v1556, %v1557
        %v1559 = vrot.slane %v1558, 1
        %v1560 = vmax.f32 %v1558, %v1559
        %v1561 = vsel %vm1539, %v1517, -inf
        %v1562 = vrot.slane %v1561, 4
        %v1563 = vmax.f32 %v1561, %v1562
        %v1564 = vrot.slane %v1563, 2
        %v1565 = vmax.f32 %v1563, %v1564
        %v1566 = vrot.slane %v1565, 1
        %v1567 = vmax.f32 %v1565, %v1566
        %v1568 = vsel %vm1539, %v1508, -inf
        %v1569 = vrot.slane %v1568, 4
        %v1570 = vmax.f32 %v1568, %v1569
        %v1571 = vrot.slane %v1570, 2
        %v1572 = vmax.f32 %v1570, %v1571
        %v1573 = vrot.slane %v1572, 1
        %v1574 = vmax.f32 %v1572, %v1573
        %v1575 = vsel %vm1539, %v1518, -inf
        %v1576 = vrot.slane %v1575, 4
        %v1577 = vmax.f32 %v1575, %v1576
        %v1578 = vrot.slane %v1577, 2
        %v1579 = vmax.f32 %v1577, %v1578
        %v1580 = vrot.slane %v1579, 1
        %v1581 = vmax.f32 %v1579, %v1580
        %v1582 = vsel %vm1539, %v1519, -inf
        %v1583 = vrot.slane %v1582, 4
        %v1584 = vmax.f32 %v1582, %v1583
        %v1585 = vrot.slane %v1584, 2
        %v1586 = vmax.f32 %v1584, %v1585
        %v1587 = vrot.slane %v1586, 1
        %v1588 = vmax.f32 %v1586, %v1587
        %v1589 = vsel %vm1539, %v1520, -inf
        %v1590 = vrot.slane %v1589, 4
        %v1591 = vmax.f32 %v1589, %v1590
        %v1592 = vrot.slane %v1591, 2
        %v1593 = vmax.f32 %v1591, %v1592
        %v1594 = vrot.slane %v1593, 1
        %v1595 = vmax.f32 %v1593, %v1594
        %v1596 = vsel %vm1539, %v1509, -inf
        %v1597 = vrot.slane %v1596, 4
        %v1598 = vmax.f32 %v1596, %v1597
        %v1599 = vrot.slane %v1598, 2
        %v1600 = vmax.f32 %v1598, %v1599
        %v1601 = vrot.slane %v1600, 1
        %v1602 = vmax.f32 %v1600, %v1601
        %v1603 = vsel %vm1539, %v1521, -inf
        %v1604 = vrot.slane %v1603, 4
        %v1605 = vmax.f32 %v1603, %v1604
        %v1606 = vrot.slane %v1605, 2
        %v1607 = vmax.f32 %v1605, %v1606
        %v1608 = vrot.slane %v1607, 1
        %v1609 = vmax.f32 %v1607, %v1608
        %v1610 = vsel %vm1539, %v1522, -inf
        %v1611 = vrot.slane %v1610, 4
        %v1612 = vmax.f32 %v1610, %v1611
        %v1613 = vrot.slane %v1612, 2
        %v1614 = vmax.f32 %v1612, %v1613
        %v1615 = vrot.slane %v1614, 1
        %v1616 = vmax.f32 %v1614, %v1615
        %v1617 = vsel %vm1539, %v1523, -inf
        %v1618 = vrot.slane %v1617, 4
        %v1619 = vmax.f32 %v1617, %v1618
        %v1620 = vrot.slane %v1619, 2
        %v1621 = vmax.f32 %v1619, %v1620
        %v1622 = vrot.slane %v1621, 1
        %v1623 = vmax.f32 %v1621, %v1622
        %v1624 = vsel %vm1539, %v1510, -inf
        %v1625 = vrot.slane %v1624, 4
        %v1626 = vmax.f32 %v1624, %v1625
        %v1627 = vrot.slane %v1626, 2
        %v1628 = vmax.f32 %v1626, %v1627
        %v1629 = vrot.slane %v1628, 1
        %v1630 = vmax.f32 %v1628, %v1629
        %v1631 = vsel %vm1539, %v1524, -inf
        %v1632 = vrot.slane %v1631, 4
        %v1633 = vmax.f32 %v1631, %v1632
        %v1634 = vrot.slane %v1633, 2
        %v1635 = vmax.f32 %v1633, %v1634
        %v1636 = vrot.slane %v1635, 1
        %v1637 = vmax.f32 %v1635, %v1636
        %v1638 = vsel %vm1539, %v1525, -inf
        %v1639 = vrot.slane %v1638, 4
        %v1640 = vmax.f32 %v1638, %v1639
        %v1641 = vrot.slane %v1640, 2
        %v1642 = vmax.f32 %v1640, %v1641
        %v1643 = vrot.slane %v1642, 1
        %v1644 = vmax.f32 %v1642, %v1643
        %v1645 = vsel %vm1539, %v1526, -inf
        %v1646 = vrot.slane %v1645, 4
        %v1647 = vmax.f32 %v1645, %v1646
        %v1648 = vrot.slane %v1647, 2
        %v1649 = vmax.f32 %v1647, %v1648
        %v1650 = vrot.slane %v1649, 1
        %v1651 = vmax.f32 %v1649, %v1650
        %v1668 = vsel %vm1106, %v1553, %v1546
        %v1669 = vsel %vm1108, %v1560, %v1668
        %v1670 = vsel %vm1110, %v1567, %v1669
        %v1671 = vsel %vm1112, %v1574, %v1670
        %v1672 = vsel %vm1114, %v1581, %v1671
        %v1673 = vsel %vm1116, %v1588, %v1672
        %v1674 = vsel %vm1118, %v1595, %v1673
        %v1675 = vsel %vm1106, %v1609, %v1602
        %v1676 = vsel %vm1108, %v1616, %v1675
        %v1677 = vsel %vm1110, %v1623, %v1676
        %v1678 = vsel %vm1112, %v1630, %v1677
        %v1679 = vsel %vm1114, %v1637, %v1678
        %v1680 = vsel %vm1116, %v1644, %v1679
        %v1681 = vsel %vm1118, %v1651, %v1680
        %v1685 = vunpack.c.l.s4 1966171168
        %v1686 = vunpack.c.0.s8 %v1685
        %v1687 = vperm.slane %v1674, %v1686
        %v1689 = vunpack.c.l.s4 1966171168
        %v1690 = vunpack.c.0.s8 %v1689
        %v1691 = vperm.slane %v1681, %v1690
        %1694 = vst [vmem:[#allocation1] ss:$2 sm:$0xff] %v1687
        %s1695 = scalar_lea.vmem [#allocation1], 1
        %1696 = vst [vmem:[%s1695] ss:$2 sm:$0xff] %v1691
        %v1697 = vld.sshfl [vmem:[#allocation1] sm:$0xff pattern:$0x75316420]
        %v1698 = vld.sshfl [vmem:[#allocation1 + $0x8] sm:$0xff pattern:$0x75316420]
        %v1701 = vpack.c.bf16 %v1697, %v1697
        %v1702 = vpack.c.bf16 %v1698, %v1698
        %v1703 = vld [vmem:[#allocation5] sm:$0xf]
        %v1704 = vld [vmem:[#allocation5 + $0x4] sm:$0xf]
        %v1705 = vld [vmem:[#allocation5 + $0x8] sm:$0xf]
        %v1706 = vld [vmem:[#allocation5 + $0xc] sm:$0xf]
        %v1707 = vld [vmem:[#allocation5 + $0x10] sm:$0xf]
        %v1708 = vld [vmem:[#allocation5 + $0x14] sm:$0xf]
        %v1709 = vld [vmem:[#allocation5 + $0x18] sm:$0xf]
        %v1710 = vld [vmem:[#allocation5 + $0x1c] sm:$0xf]
        %v1711 = vld [vmem:[#allocation5 + $0x20] sm:$0xf]
        %v1712 = vld [vmem:[#allocation5 + $0x24] sm:$0xf]
        %v1713 = vld [vmem:[#allocation5 + $0x28] sm:$0xf]
        %v1714 = vld [vmem:[#allocation5 + $0x2c] sm:$0xf]
        %v1715 = vld [vmem:[#allocation5 + $0x30] sm:$0xf]
        %v1716 = vld [vmem:[#allocation5 + $0x34] sm:$0xf]
        %v1717 = vld [vmem:[#allocation5 + $0x38] sm:$0xf]
        %v1718 = vld [vmem:[#allocation5 + $0x3c] sm:$0xf]
        %v1719 = vld [vmem:[#allocation5 + $0x40] sm:$0xf]
        %v1720 = vld [vmem:[#allocation5 + $0x44] sm:$0xf]
        %v1721 = vld [vmem:[#allocation5 + $0x48] sm:$0xf]
        %v1722 = vld [vmem:[#allocation5 + $0x4c] sm:$0xf]
        %v1723 = vld [vmem:[#allocation5 + $0x50] sm:$0xf]
        %v1724 = vld [vmem:[#allocation5 + $0x54] sm:$0xf]
        %v1725 = vld [vmem:[#allocation5 + $0x58] sm:$0xf]
        %v1726 = vld [vmem:[#allocation5 + $0x5c] sm:$0xf]
        %v1727 = vld [vmem:[#allocation5 + $0x60] sm:$0xf]
        %v1728 = vld [vmem:[#allocation5 + $0x64] sm:$0xf]
        %v1729 = vld [vmem:[#allocation5 + $0x68] sm:$0xf]
        %v1730 = vld [vmem:[#allocation5 + $0x6c] sm:$0xf]
        %v1731 = vld [vmem:[#allocation5 + $0x70] sm:$0xf]
        %v1732 = vld [vmem:[#allocation5 + $0x74] sm:$0xf]
        %v1733 = vld [vmem:[#allocation5 + $0x78] sm:$0xf]
        %v1734 = vld [vmem:[#allocation5 + $0x7c] sm:$0xf]
        %v1735 = vld [vmem:[%s6] sm:$0x1]
        %v1737 = vperm.slane %v1735, 0
        %v1771 = vunpack.c.l.b16 %v1703
        %v1772 = vunpack.c.l.b16 %v1704
        %v1773 = vunpack.c.l.b16 %v1705
        %v1774 = vunpack.c.l.b16 %v1706
        %v1775 = vunpack.c.l.b16 %v1707
        %v1776 = vunpack.c.l.b16 %v1708
        %v1777 = vunpack.c.l.b16 %v1709
        %v1778 = vunpack.c.l.b16 %v1710
        %v1779 = vunpack.c.l.b16 %v1711
        %v1780 = vunpack.c.l.b16 %v1712
        %v1781 = vunpack.c.l.b16 %v1713
        %v1782 = vunpack.c.l.b16 %v1714
        %v1783 = vunpack.c.l.b16 %v1715
        %v1784 = vunpack.c.l.b16 %v1716
        %v1785 = vunpack.c.l.b16 %v1717
        %v1786 = vunpack.c.l.b16 %v1718
        %v1787 = vunpack.c.l.b16 %v1719
        %v1788 = vunpack.c.l.b16 %v1720
        %v1789 = vunpack.c.l.b16 %v1721
        %v1790 = vunpack.c.l.b16 %v1722
        %v1791 = vunpack.c.l.b16 %v1723
        %v1792 = vunpack.c.l.b16 %v1724
        %v1793 = vunpack.c.l.b16 %v1725
        %v1794 = vunpack.c.l.b16 %v1726
        %v1795 = vunpack.c.l.b16 %v1727
        %v1796 = vunpack.c.l.b16 %v1728
        %v1797 = vunpack.c.l.b16 %v1729
        %v1798 = vunpack.c.l.b16 %v1730
        %v1799 = vunpack.c.l.b16 %v1731
        %v1800 = vunpack.c.l.b16 %v1732
        %v1801 = vunpack.c.l.b16 %v1733
        %v1802 = vunpack.c.l.b16 %v1734
        %v1803 = vpack.c.b16 %v1772, %v1771
        %v1804 = vpack.c.b16 %v1774, %v1773
        %v1805 = vpack.c.b16 %v1776, %v1775
        %v1806 = vpack.c.b16 %v1778, %v1777
        %v1807 = vpack.c.b16 %v1780, %v1779
        %v1808 = vpack.c.b16 %v1782, %v1781
        %v1809 = vpack.c.b16 %v1784, %v1783
        %v1810 = vpack.c.b16 %v1786, %v1785
        %v1811 = vpack.c.b16 %v1788, %v1787
        %v1812 = vpack.c.b16 %v1790, %v1789
        %v1813 = vpack.c.b16 %v1792, %v1791
        %v1814 = vpack.c.b16 %v1794, %v1793
        %v1815 = vpack.c.b16 %v1796, %v1795
        %v1816 = vpack.c.b16 %v1798, %v1797
        %v1817 = vpack.c.b16 %v1800, %v1799
        %v1818 = vpack.c.b16 %v1802, %v1801
        %1835 = vmatpush.bf16.msra.mxu0 %v1810
        %1836 = vmatpush.bf16.msra.mxu0 %v1809
        %1837 = vmatpush.bf16.msra.mxu0 %v1808
        %1838 = vmatpush.bf16.msra.mxu0 %v1807
        %1839 = vmatpush.bf16.msra.mxu0 %v1806
        %1840 = vmatpush.bf16.msra.mxu0 %v1805
        %1841 = vmatpush.bf16.msra.mxu0 %v1804
        %1842 = vmatpush.bf16.msra.mxu0 %v1803
        %1843 = vmatmul.bf16.gmra.mxu0 %v1701
        %v1844 = vpop.f32.mrf.mxu0
        %v1845 = vadd.f32 %v1737, %v1844
        %v1846 = vpop.f32.mrf.mxu0
        %1847 = vdwg.mxu0
        %1848 = vmatpush.bf16.msra.mxu0 %v1818
        %1849 = vmatpush.bf16.msra.mxu0 %v1817
        %1850 = vmatpush.bf16.msra.mxu0 %v1816
        %1851 = vmatpush.bf16.msra.mxu0 %v1815
        %1852 = vmatpush.bf16.msra.mxu0 %v1814
        %1853 = vmatpush.bf16.msra.mxu0 %v1813
        %1854 = vmatpush.bf16.msra.mxu0 %v1812
        %1855 = vmatpush.bf16.msra.mxu0 %v1811
        %1856 = vmatmul.bf16.gmra.mxu0 %v1702
        %v1857 = vpop.f32.mrf.mxu0
        %v1858 = vadd.f32 %v1845, %v1857
        %v1859 = vpop.f32.mrf.mxu0
        %1860 = vdwg.mxu0
        %1861 = vst [vmem:[%s306] sm:$0xff] %v1858
        %s1862 = sand.u32 %s183, 1
        %s1863 = scalar_lea.sflag [#allocation4], %s1862
        %s1864 = sand.u32 %s183, 1
        %s1865 = smul.addr %s1864, 8
        %s1866 = scalar_lea.vmem [#allocation7], %s1865
        // Predicated region
        $region57: #{tpu_custom_call.1} parent=47 // pred_check
          %p1867 = pneg %p193
        $region58: #{tpu_custom_call.1} parent=47 // pred_check_branch
          %1869 = sbr.rel (%p1867) target = $region60
        $region59: #{tpu_custom_call.1} parent=47 // pred_region
          %1871 = vsyncadd %s1863, 0
          %s1872 = smul.addr %s23, 8
          %s1873 = scalar_lea.hbm %s7, %s1872
          %s1875 = sshll.u32 %s1866, 4
          %s1876 = int_to_ptr.vmem [resolvable:$true] %s1875
          %s1877 = sshll.u32 %s1873, 4
          %s1878 = int_to_ptr.hbm [resolvable:$true] %s1877
          %1880 = dma.vmem_to_hbm [thread:$0]  %s1876, 128, %s1878, %s1863
        $region60: #{tpu_custom_call.1} parent=47 // pred_fallthru
          _
      $region48: #{tpu_custom_call.1} parent=5 // pred_fallthru
        _
      %p1881 = scmp.le.s32.totalorder 2, %s18
      // Predicated region
      $region61: #{tpu_custom_call.1} parent=5 // pred_check
        %p1882 = pneg %p1881
      $region62: #{tpu_custom_call.1} parent=5 // pred_check_branch
        %1884 = sbr.rel (%p1882) target = $region64
      $region63: #{tpu_custom_call.1} parent=5 // pred_region
        %s1885 = ssub.s32 %s18, 2
        // Predicated region
        $region65: #{tpu_custom_call.1} parent=63 // pred_check
          %p1886 = pneg %p199
        $region66: #{tpu_custom_call.1} parent=63 // pred_check_branch
          %1888 = sbr.rel (%p1886) target = $region68
        $region67: #{tpu_custom_call.1} parent=63 // pred_region
          %s1889 = sand.u32 %s184, 1
          %s1890 = scalar_lea.sflag [#allocation4], %s1889
          %s1891 = sand.u32 %s184, 1
          %s1892 = smul.addr %s1891, 8
          %s1893 = scalar_lea.vmem [#allocation7], %s1892
          %1895 = dma.done %s1890, 128
        $region68: #{tpu_custom_call.1} parent=63 // pred_fallthru
          _
      $region64: #{tpu_custom_call.1} parent=5 // pred_fallthru
        _
    $region6: #{tpu_custom_call.1} parent=1 // loop_footer
      %s22 = sadd.s32 1, %s18
    $region7: #{tpu_custom_call.1} parent=1 // loop_footer_branch
      %17 = sbr.rel target = $region3
    $region8: #{tpu_custom_call.1} parent=1 // loop_exit
      _
    %1896 = vsyncpa [#allocation3], 1
    %s1897 = scalar_lea.sflag [#allocation3], 1
    %1898 = vsyncpa %s1897, 1
    %1899 = vsyncpa [#allocation6], 1
    %1900 = vsyncpa [#allocation4], 1
    %s1901 = scalar_lea.sflag [#allocation4], 1
    %1902 = vsyncpa %s1901, 1

</llo_original>
